<compile_context>
chip_gen: v7x
topology: tpu7x:2x2x1
jax: 0.10.0
libtpu: 0.0.40
codegen_flags: <defaults>
</compile_context>

<pallas_src>
import functools
import math

import jax
import jax.numpy as jnp
from jax.experimental import pallas as pl
from jax.experimental.pallas import tpu as pltpu

EPS = 1e-5          # F.layer_norm default eps
NEG_INF = -1e30     # softmax mask value for padded key columns


def _ln(x, gamma):
    """LayerNorm over the last dim; beta is a zero buffer in the torch module.
    One-pass stats: sum(x) and sum(x*x) are independent cross-lane reductions."""
    inv_d = 1.0 / x.shape[-1]
    s1 = jnp.sum(x, axis=-1, keepdims=True)
    s2 = jnp.sum(x * x, axis=-1, keepdims=True)
    mu = s1 * inv_d
    var = jnp.maximum(s2 * inv_d - mu * mu, 0.0)
    return (x - mu) * jax.lax.rsqrt(var + EPS) * gamma


def _fused_kernel(x_hbm, gfin,
                  g_attn_pre, wq, wk, wv, wout, g_attn_out,
                  g_ff_pre, wa, wg, g_ff_ln, w2,
                  o_ref, ctx_scr,
                  *, B, N, H, dh, n_valid):
    """One grid step == one transformer block. Activations live in o_ref (resident)."""
    layer = pl.program_id(0)
    depth = pl.num_programs(0)

    @pl.when(layer == 0)
    def _():
        # Pull the activations straight into the resident output block (single slab).
        pltpu.sync_copy(x_hbm, o_ref)

    x = o_ref[...]                                   # (B*N, D) f32

    # ---------------- attention (PreNorm) ----------------
    xnb = _ln(x, g_attn_pre[0]).astype(jnp.bfloat16)
    # Head-fused lane-dense projections (q scale already folded into wq).
    q = jnp.dot(xnb, wq[0], preferred_element_type=jnp.float32)   # (BN, H*dh)
    k = jnp.dot(xnb, wk[0], preferred_element_type=jnp.float32)
    v = jnp.dot(xnb, wv[0], preferred_element_type=jnp.float32)

    # Per-head attention core; each head's (B, N, N) score/prob dies within its iteration,
    # ctx is written into its lane slice of a small VMEM scratch.
    for h in range(H):
        sl = slice(h * dh, (h + 1) * dh)
        qh = q[:, sl].reshape(B, N, dh)
        kh = k[:, sl].reshape(B, N, dh)
        vh = v[:, sl].reshape(B, N, dh)
        sim = jnp.einsum('bid,bjd->bij', qh, kh,
                         preferred_element_type=jnp.float32)      # (B, N, N)
        if n_valid < N:   # static branch: mask padded key columns
            col = jax.lax.broadcasted_iota(jnp.int32, sim.shape, 2)
            sim = jnp.where(col < n_valid, sim, NEG_INF)
        sim = sim - jnp.max(sim, axis=-1, keepdims=True)
        p = jnp.exp(sim)
        p = p * pl.reciprocal(jnp.sum(p, axis=-1, keepdims=True))  # exact, EUP slot
        ctx_h = jnp.einsum('bij,bjd->bid', p, vh,
                           preferred_element_type=jnp.float32)     # (B, N, dh)
        ctx_scr[:, sl] = ctx_h.reshape(B * N, dh)

    # Single full-K output projection: (BN, H*dh) @ (H*dh, D)
    attn = jnp.dot(ctx_scr[...].astype(jnp.bfloat16), wout[0],
                   preferred_element_type=jnp.float32)             # (BN, D)
    x = x + _ln(attn, g_attn_out[0])                 # to_out = Linear -> LayerNorm, residual

    # ---------------- feed-forward (PreNorm, SwiGLU) ----------------
    xnb = _ln(x, g_ff_pre[0]).astype(jnp.bfloat16)
    a = jnp.dot(xnb, wa[0], preferred_element_type=jnp.float32)    # (BN, ffin)
    g = jnp.dot(xnb, wg[0], preferred_element_type=jnp.float32)    # (BN, ffin)
    swig = _ln(a * (g * jax.nn.sigmoid(g)), g_ff_ln[0]).astype(jnp.bfloat16)
    x = x + jnp.dot(swig, w2[0], preferred_element_type=jnp.float32)

    @pl.when(layer < depth - 1)
    def _():
        o_ref[...] = x

    @pl.when(layer == depth - 1)
    def _():
        o_ref[...] = _ln(x, gfin[...])               # fused final norm_out


def fused_transformer(xf, params, *, B, N, heads, dim_head, n_valid):
    BN, D = xf.shape
    depth = params["wq"].shape[0]
    Hdh = heads * dim_head
    ffin = params["wa"].shape[-1]

    weight_keys = ("g_attn_pre", "wq", "wk", "wv", "wout", "g_attn_out",
                   "g_ff_pre", "wa", "wg", "g_ff_ln", "w2")
    weights = [params[k] for k in weight_keys]

    def layer_spec(w):
        nd = w.ndim
        return pl.BlockSpec((1,) + w.shape[1:], lambda l, nd=nd: (l,) + (0,) * (nd - 1))

    # explicit VMEM budget: double-buffered layer weights + resident activations + intermediates
    layer_w_bytes = sum(math.prod(w.shape[1:]) * w.dtype.itemsize for w in weights)
    interm_bytes = 4 * (3 * BN * Hdh + 2 * B * N * N + 3 * BN * ffin + 3 * BN * D)
    est = BN * D * 4 + BN * Hdh * 4 + 2 * layer_w_bytes + interm_bytes + (4 << 20)
    vmem_limit = max(32 << 20, min(100 << 20, int(est)))

    kernel = functools.partial(_fused_kernel, B=B, N=N, H=heads, dh=dim_head,
                               n_valid=n_valid)

    in_specs = [pl.BlockSpec(memory_space=pl.ANY),                     # x: manual DMA at layer 0
                pl.BlockSpec((1, D), lambda l: (0, 0))]                # final-norm gamma
    in_specs += [layer_spec(w) for w in weights]

    return pl.pallas_call(
        kernel,
        out_shape=jax.ShapeDtypeStruct((BN, D), jnp.float32),
        grid=(depth,),
        in_specs=in_specs,
        out_specs=pl.BlockSpec((BN, D), lambda l: (0, 0)),             # resident accumulator
        scratch_shapes=[pltpu.VMEM((BN, Hdh), jnp.float32)],           # per-layer ctx buffer
        compiler_params=pltpu.CompilerParams(
            dimension_semantics=("arbitrary",),
            vmem_limit_bytes=vmem_limit),
    )(xf, params["norm_out_gamma"], *weights)


def text_transformer_forward(tokens, params, *, heads, dim_head):
    # --- glue in plain JAX (fused by jit with the kernel's input DMA):
    #     embedding gather, abs pos emb, cls prepend, seq padding ---
    B, n = tokens.shape
    D = params["token_emb"].shape[-1]
    x = params["token_emb"][tokens]                               # (B, n, D)
    x = x + params["abs_pos_emb"][:n][None]                       # + abs pos emb
    cls = jnp.broadcast_to(params["cls_token"][None, None, :], (B, 1, D))
    x = jnp.concatenate([cls, x], axis=1)                         # (B, n+1, D)
    n_valid = n + 1
    N = ((n_valid + 7) // 8) * 8                                  # sublane-align the sequence
    if N > n_valid:
        x = jnp.pad(x, ((0, 0), (0, N - n_valid), (0, 0)))

    # --- hot path: ONE fused Pallas call for all layers + final LayerNorm ---
    xf = x.reshape(B * N, D)
    out = fused_transformer(xf, params, B=B, N=N, heads=heads,
                            dim_head=dim_head, n_valid=n_valid)
    return out.reshape(B, N, D)[:, :n_valid]


def init_params(key, *, num_tokens, max_seq_len, dim, dim_head, heads, depth, ff_mult):
    """Weights stored (in_features, out_features), heads fused on the output axis:
       wq/wk/wv: (depth, dim, heads*dim_head)   [to_qkv chunked; q scale folded into wq]
       wout    : (depth, heads*dim_head, dim)
       wa/wg   : (depth, dim, ff_inner)         [FF Linear1 chunked for SwiGLU]
       w2      : (depth, ff_inner, dim)
       Matmul weights are bf16; LayerNorm gammas are f32."""
    ffin = int(dim * ff_mult)
    Hdh = heads * dim_head
    keys = iter(jax.random.split(key, 16))

    def nrm(shape, scale=1.0, dtype=jnp.float32):
        return (scale * jax.random.normal(next(keys), shape)).astype(dtype)

    bf = jnp.bfloat16
    wq = nrm((depth, dim, Hdh), dim ** -0.5) * (dim_head ** -0.5)   # fold q scale
    params = {
        "token_emb": nrm((num_tokens, dim)),
        "abs_pos_emb": nrm((max_seq_len, dim)),
        "cls_token": nrm((dim,)),
        "norm_out_gamma": jnp.ones((1, dim), jnp.float32),
        # per-layer params stacked along a leading depth axis (streamed per grid step)
        "g_attn_pre": jnp.ones((depth, 1, dim), jnp.float32),
        "wq": wq.astype(bf),
        "wk": nrm((depth, dim, Hdh), dim ** -0.5, bf),
        "wv": nrm((depth, dim, Hdh), dim ** -0.5, bf),
        "wout": nrm((depth, Hdh, dim), Hdh ** -0.5, bf),
        "g_attn_out": jnp.ones((depth, 1, dim), jnp.float32),
        "g_ff_pre": jnp.ones((depth, 1, dim), jnp.float32),
        "wa": nrm((depth, dim, ffin), dim ** -0.5, bf),
        "wg": nrm((depth, dim, ffin), dim ** -0.5, bf),
        "g_ff_ln": jnp.ones((depth, 1, ffin), jnp.float32),
        "w2": nrm((depth, ffin, dim), ffin ** -0.5, bf),
    }
    return params


if __name__ == "__main__":
    # Small config: dim=64, dim_head=32, heads=2, depth=2, ff_mult=4
    DIM, DIM_HEAD, HEADS, DEPTH, FF_MULT = 64, 32, 2, 2, 4
    NUM_TOKENS, MAX_SEQ_LEN = 64, 16
    B, N_TOK = 2, 7   # sequence becomes 8 after the cls token (already sublane-aligned)

    key = jax.random.PRNGKey(0)
    pkey, tkey = jax.random.split(key)
    params = init_params(pkey, num_tokens=NUM_TOKENS, max_seq_len=MAX_SEQ_LEN,
                         dim=DIM, dim_head=DIM_HEAD, heads=HEADS,
                         depth=DEPTH, ff_mult=FF_MULT)
    tokens = jax.random.randint(tkey, (B, N_TOK), 0, NUM_TOKENS, dtype=jnp.int32)

    run = jax.jit(functools.partial(text_transformer_forward,
                                    heads=HEADS, dim_head=DIM_HEAD))
    out = jax.block_until_ready(run(tokens, params))
    assert out.shape == (B, N_TOK + 1, DIM)
    assert bool(jnp.all(jnp.isfinite(out)))
    print("KERNEL_OK")
</pallas_src>

<mosaic_0001>
module attributes {stable_mosaic.version = 11 : i64} {
  func.func @_fused_kernel(%arg0: i32, %arg1: memref<16x64xf32, #tpu.memory_space<any>>, %arg2: memref<1x64xf32, #tpu.memory_space<vmem>>, %arg3: memref<1x1x64xf32, #tpu.memory_space<vmem>>, %arg4: memref<1x64x64xbf16, #tpu.memory_space<vmem>>, %arg5: memref<1x64x64xbf16, #tpu.memory_space<vmem>>, %arg6: memref<1x64x64xbf16, #tpu.memory_space<vmem>>, %arg7: memref<1x64x64xbf16, #tpu.memory_space<vmem>>, %arg8: memref<1x1x64xf32, #tpu.memory_space<vmem>>, %arg9: memref<1x1x64xf32, #tpu.memory_space<vmem>>, %arg10: memref<1x64x256xbf16, #tpu.memory_space<vmem>>, %arg11: memref<1x64x256xbf16, #tpu.memory_space<vmem>>, %arg12: memref<1x1x256xf32, #tpu.memory_space<vmem>>, %arg13: memref<1x256x64xbf16, #tpu.memory_space<vmem>>, %arg14: memref<16x64xf32, #tpu.memory_space<vmem>>, %arg15: memref<16x64xf32, #tpu.memory_space<vmem>>) attributes {dimension_semantics = [#tpu.dimension_semantics<arbitrary>], iteration_bounds = array<i64: 2>, scalar_prefetch = 0 : i64, scratch_operands = 1 : i64, tpu.core_type = #tpu.core_type<tc>, window_params = [{}, {pipeline_mode = #tpu.pipeline_mode<synchronous>, transform_indices = @transform_1, window_bounds = array<i64: 1, 64>}, {transform_indices = @transform_2, window_bounds = array<i64: 1, 1, 64>}, {transform_indices = @transform_3, window_bounds = array<i64: 1, 64, 64>}, {transform_indices = @transform_4, window_bounds = array<i64: 1, 64, 64>}, {transform_indices = @transform_5, window_bounds = array<i64: 1, 64, 64>}, {transform_indices = @transform_6, window_bounds = array<i64: 1, 64, 64>}, {transform_indices = @transform_7, window_bounds = array<i64: 1, 1, 64>}, {transform_indices = @transform_8, window_bounds = array<i64: 1, 1, 64>}, {transform_indices = @transform_9, window_bounds = array<i64: 1, 64, 256>}, {transform_indices = @transform_10, window_bounds = array<i64: 1, 64, 256>}, {transform_indices = @transform_11, window_bounds = array<i64: 1, 1, 256>}, {transform_indices = @transform_12, window_bounds = array<i64: 1, 256, 64>}, {pipeline_mode = #tpu.pipeline_mode<synchronous>, transform_indices = @transform_13, window_bounds = array<i64: 16, 64>}]} {
    %c0_i32 = arith.constant 0 : i32
    %0 = arith.cmpi eq, %arg0, %c0_i32 : i32
    %1 = arith.extui %0 : i1 to i32
    %c0_i32_0 = arith.constant 0 : i32
    %2 = arith.cmpi ne, %1, %c0_i32_0 : i32
    scf.if %2 {
      "tpu.region"() ({
        %181 = tpu.sem_alloc : memref<!tpu.dma_semaphore, #tpu.memory_space<semaphore_mem>>
        tpu.enqueue_dma source(%arg1 : memref<16x64xf32, #tpu.memory_space<any>>) target(%arg14 : memref<16x64xf32, #tpu.memory_space<vmem>>) target_semaphore(%181 : memref<!tpu.dma_semaphore, #tpu.memory_space<semaphore_mem>>)
        tpu.wait_dma2 semaphore(%181 : memref<!tpu.dma_semaphore, #tpu.memory_space<semaphore_mem>>) src(%arg1 : memref<16x64xf32, #tpu.memory_space<any>>) dst(%arg14 : memref<16x64xf32, #tpu.memory_space<vmem>>)
        tpu.yield
      }) : () -> ()
    } else {
    }
    %c0 = arith.constant 0 : index
    %c0_1 = arith.constant 0 : index
    %3 = vector.load %arg14[%c0, %c0_1] : memref<16x64xf32, #tpu.memory_space<vmem>>, vector<16x64xf32>
    %c0_2 = arith.constant 0 : index
    %c0_3 = arith.constant 0 : index
    %c0_4 = arith.constant 0 : index
    %4 = vector.load %arg3[%c0_2, %c0_3, %c0_4] : memref<1x1x64xf32, #tpu.memory_space<vmem>>, vector<1x1x64xf32>
    %5 = vector.shape_cast %4 : vector<1x1x64xf32> to vector<1x64xf32>
    %cst = arith.constant dense<0.000000e+00> : vector<16xf32>
    %6 = vector.multi_reduction <add>, %3, %cst [1] : vector<16x64xf32> to vector<16xf32>
    %7 = vector.shape_cast %6 : vector<16xf32> to vector<16x1xf32>
    %8 = arith.mulf %3, %3 : vector<16x64xf32>
    %cst_5 = arith.constant dense<0.000000e+00> : vector<16xf32>
    %9 = vector.multi_reduction <add>, %8, %cst_5 [1] : vector<16x64xf32> to vector<16xf32>
    %10 = vector.shape_cast %9 : vector<16xf32> to vector<16x1xf32>
    %cst_6 = arith.constant 1.562500e-02 : f32
    %11 = vector.broadcast %cst_6 : f32 to vector<16x1xf32>
    %12 = arith.mulf %7, %11 : vector<16x1xf32>
    %cst_7 = arith.constant 1.562500e-02 : f32
    %13 = vector.broadcast %cst_7 : f32 to vector<16x1xf32>
    %14 = arith.mulf %10, %13 : vector<16x1xf32>
    %15 = arith.mulf %12, %12 : vector<16x1xf32>
    %16 = arith.subf %14, %15 : vector<16x1xf32>
    %cst_8 = arith.constant 0.000000e+00 : f32
    %17 = vector.broadcast %cst_8 : f32 to vector<16x1xf32>
    %18 = arith.maximumf %16, %17 : vector<16x1xf32>
    %19 = vector.broadcast %12 : vector<16x1xf32> to vector<16x64xf32>
    %20 = arith.subf %3, %19 : vector<16x64xf32>
    %cst_9 = arith.constant 9.99999974E-6 : f32
    %21 = vector.broadcast %cst_9 : f32 to vector<16x1xf32>
    %22 = arith.addf %18, %21 : vector<16x1xf32>
    %23 = math.rsqrt %22 : vector<16x1xf32>
    %24 = vector.broadcast %23 : vector<16x1xf32> to vector<16x64xf32>
    %25 = arith.mulf %20, %24 : vector<16x64xf32>
    %26 = vector.broadcast %5 : vector<1x64xf32> to vector<16x64xf32>
    %27 = arith.mulf %25, %26 : vector<16x64xf32>
    %28 = arith.truncf %27 : vector<16x64xf32> to vector<16x64xbf16>
    %c0_10 = arith.constant 0 : index
    %c0_11 = arith.constant 0 : index
    %c0_12 = arith.constant 0 : index
    %29 = vector.load %arg4[%c0_10, %c0_11, %c0_12] : memref<1x64x64xbf16, #tpu.memory_space<vmem>>, vector<1x64x64xbf16>
    %30 = vector.shape_cast %29 : vector<1x64x64xbf16> to vector<64x64xbf16>
    %cst_13 = arith.constant dense<0.000000e+00> : vector<16x64xf32>
    %31 = tpu.matmul %28, %30, %cst_13 {dimension_numbers = #tpu.dot_dimension_numbers<[1], [0], [0], [1], [0, 0, 1, 1], [], []>} : vector<16x64xbf16>, vector<64x64xbf16>, vector<16x64xf32> -> vector<16x64xf32>
    %c0_14 = arith.constant 0 : index
    %c0_15 = arith.constant 0 : index
    %c0_16 = arith.constant 0 : index
    %32 = vector.load %arg5[%c0_14, %c0_15, %c0_16] : memref<1x64x64xbf16, #tpu.memory_space<vmem>>, vector<1x64x64xbf16>
    %33 = vector.shape_cast %32 : vector<1x64x64xbf16> to vector<64x64xbf16>
    %cst_17 = arith.constant dense<0.000000e+00> : vector<16x64xf32>
    %34 = tpu.matmul %28, %33, %cst_17 {dimension_numbers = #tpu.dot_dimension_numbers<[1], [0], [0], [1], [0, 0, 1, 1], [], []>} : vector<16x64xbf16>, vector<64x64xbf16>, vector<16x64xf32> -> vector<16x64xf32>
    %c0_18 = arith.constant 0 : index
    %c0_19 = arith.constant 0 : index
    %c0_20 = arith.constant 0 : index
    %35 = vector.load %arg6[%c0_18, %c0_19, %c0_20] : memref<1x64x64xbf16, #tpu.memory_space<vmem>>, vector<1x64x64xbf16>
    %36 = vector.shape_cast %35 : vector<1x64x64xbf16> to vector<64x64xbf16>
    %cst_21 = arith.constant dense<0.000000e+00> : vector<16x64xf32>
    %37 = tpu.matmul %28, %36, %cst_21 {dimension_numbers = #tpu.dot_dimension_numbers<[1], [0], [0], [1], [0, 0, 1, 1], [], []>} : vector<16x64xbf16>, vector<64x64xbf16>, vector<16x64xf32> -> vector<16x64xf32>
    %38 = vector.extract_strided_slice %31 {offsets = [0, 0], sizes = [16, 32], strides = [1, 1]} : vector<16x64xf32> to vector<16x32xf32>
    %39 = vector.shape_cast %38 : vector<16x32xf32> to vector<2x8x32xf32>
    %40 = vector.extract_strided_slice %34 {offsets = [0, 0], sizes = [16, 32], strides = [1, 1]} : vector<16x64xf32> to vector<16x32xf32>
    %41 = vector.shape_cast %40 : vector<16x32xf32> to vector<2x8x32xf32>
    %42 = vector.extract_strided_slice %37 {offsets = [0, 0], sizes = [16, 32], strides = [1, 1]} : vector<16x64xf32> to vector<16x32xf32>
    %43 = vector.shape_cast %42 : vector<16x32xf32> to vector<2x8x32xf32>
    "tpu.trace_start"() <{level = 10 : i32, message = "bid,bjd->bij"}> : () -> ()
    %cst_22 = arith.constant dense<0.000000e+00> : vector<2x8x8xf32>
    %44 = tpu.matmul %39, %41, %cst_22 {dimension_numbers = #tpu.dot_dimension_numbers<[2], [2], [1], [1], [0, 0, 0, 1, 1, 1], [0], [0]>} : vector<2x8x32xf32>, vector<2x8x32xf32>, vector<2x8x8xf32> -> vector<2x8x8xf32>
    "tpu.trace_stop"() : () -> ()
    %cst_23 = arith.constant dense<0xFF800000> : vector<2x8xf32>
    %45 = vector.multi_reduction <maximumf>, %44, %cst_23 [2] : vector<2x8x8xf32> to vector<2x8xf32>
    %46 = vector.shape_cast %45 : vector<2x8xf32> to vector<2x8x1xf32>
    %47 = vector.broadcast %46 : vector<2x8x1xf32> to vector<2x8x8xf32>
    %48 = arith.subf %44, %47 : vector<2x8x8xf32>
    %49 = math.exp %48 : vector<2x8x8xf32>
    %cst_24 = arith.constant dense<0.000000e+00> : vector<2x8xf32>
    %50 = vector.multi_reduction <add>, %49, %cst_24 [2] : vector<2x8x8xf32> to vector<2x8xf32>
    %51 = vector.shape_cast %50 : vector<2x8xf32> to vector<2x8x1xf32>
    %52 = tpu.reciprocal %51 : vector<2x8x1xf32> -> vector<2x8x1xf32>
    %53 = vector.broadcast %52 : vector<2x8x1xf32> to vector<2x8x8xf32>
    %54 = arith.mulf %49, %53 : vector<2x8x8xf32>
    "tpu.trace_start"() <{level = 10 : i32, message = "bij,bjd->bid"}> : () -> ()
    %cst_25 = arith.constant dense<0.000000e+00> : vector<2x8x32xf32>
    %55 = tpu.matmul %54, %43, %cst_25 {dimension_numbers = #tpu.dot_dimension_numbers<[2], [1], [1], [2], [0, 0, 0, 1, 1, 2], [0], [0]>} : vector<2x8x8xf32>, vector<2x8x32xf32>, vector<2x8x32xf32> -> vector<2x8x32xf32>
    "tpu.trace_stop"() : () -> ()
    %56 = vector.shape_cast %55 : vector<2x8x32xf32> to vector<16x32xf32>
    %c0_26 = arith.constant 0 : index
    %c0_27 = arith.constant 0 : index
    %57 = vector.load %arg15[%c0_26, %c0_27] : memref<16x64xf32, #tpu.memory_space<vmem>>, vector<16x32xf32>
    tpu.vector_store %arg15[%c0_26, %c0_27], %56 {strides = array<i32>} : memref<16x64xf32, #tpu.memory_space<vmem>>, vector<16x32xf32>,
    %58 = vector.extract_strided_slice %31 {offsets = [0, 32], sizes = [16, 32], strides = [1, 1]} : vector<16x64xf32> to vector<16x32xf32>
    %59 = vector.shape_cast %58 : vector<16x32xf32> to vector<2x8x32xf32>
    %60 = vector.extract_strided_slice %34 {offsets = [0, 32], sizes = [16, 32], strides = [1, 1]} : vector<16x64xf32> to vector<16x32xf32>
    %61 = vector.shape_cast %60 : vector<16x32xf32> to vector<2x8x32xf32>
    %62 = vector.extract_strided_slice %37 {offsets = [0, 32], sizes = [16, 32], strides = [1, 1]} : vector<16x64xf32> to vector<16x32xf32>
    %63 = vector.shape_cast %62 : vector<16x32xf32> to vector<2x8x32xf32>
    "tpu.trace_start"() <{level = 10 : i32, message = "bid,bjd->bij"}> : () -> ()
    %cst_28 = arith.constant dense<0.000000e+00> : vector<2x8x8xf32>
    %64 = tpu.matmul %59, %61, %cst_28 {dimension_numbers = #tpu.dot_dimension_numbers<[2], [2], [1], [1], [0, 0, 0, 1, 1, 1], [0], [0]>} : vector<2x8x32xf32>, vector<2x8x32xf32>, vector<2x8x8xf32> -> vector<2x8x8xf32>
    "tpu.trace_stop"() : () -> ()
    %cst_29 = arith.constant dense<0xFF800000> : vector<2x8xf32>
    %65 = vector.multi_reduction <maximumf>, %64, %cst_29 [2] : vector<2x8x8xf32> to vector<2x8xf32>
    %66 = vector.shape_cast %65 : vector<2x8xf32> to vector<2x8x1xf32>
    %67 = vector.broadcast %66 : vector<2x8x1xf32> to vector<2x8x8xf32>
    %68 = arith.subf %64, %67 : vector<2x8x8xf32>
    %69 = math.exp %68 : vector<2x8x8xf32>
    %cst_30 = arith.constant dense<0.000000e+00> : vector<2x8xf32>
    %70 = vector.multi_reduction <add>, %69, %cst_30 [2] : vector<2x8x8xf32> to vector<2x8xf32>
    %71 = vector.shape_cast %70 : vector<2x8xf32> to vector<2x8x1xf32>
    %72 = tpu.reciprocal %71 : vector<2x8x1xf32> -> vector<2x8x1xf32>
    %73 = vector.broadcast %72 : vector<2x8x1xf32> to vector<2x8x8xf32>
    %74 = arith.mulf %69, %73 : vector<2x8x8xf32>
    "tpu.trace_start"() <{level = 10 : i32, message = "bij,bjd->bid"}> : () -> ()
    %cst_31 = arith.constant dense<0.000000e+00> : vector<2x8x32xf32>
    %75 = tpu.matmul %74, %63, %cst_31 {dimension_numbers = #tpu.dot_dimension_numbers<[2], [1], [1], [2], [0, 0, 0, 1, 1, 2], [0], [0]>} : vector<2x8x8xf32>, vector<2x8x32xf32>, vector<2x8x32xf32> -> vector<2x8x32xf32>
    "tpu.trace_stop"() : () -> ()
    %76 = vector.shape_cast %75 : vector<2x8x32xf32> to vector<16x32xf32>
    %c0_32 = arith.constant 0 : index
    %c32 = arith.constant 32 : index
    %77 = vector.load %arg15[%c0_32, %c32] : memref<16x64xf32, #tpu.memory_space<vmem>>, vector<16x32xf32>
    tpu.vector_store %arg15[%c0_32, %c32], %76 {strides = array<i32>} : memref<16x64xf32, #tpu.memory_space<vmem>>, vector<16x32xf32>,
    %c0_33 = arith.constant 0 : index
    %c0_34 = arith.constant 0 : index
    %78 = vector.load %arg15[%c0_33, %c0_34] : memref<16x64xf32, #tpu.memory_space<vmem>>, vector<16x64xf32>
    %79 = arith.truncf %78 : vector<16x64xf32> to vector<16x64xbf16>
    %c0_35 = arith.constant 0 : index
    %c0_36 = arith.constant 0 : index
    %c0_37 = arith.constant 0 : index
    %80 = vector.load %arg7[%c0_35, %c0_36, %c0_37] : memref<1x64x64xbf16, #tpu.memory_space<vmem>>, vector<1x64x64xbf16>
    %81 = vector.shape_cast %80 : vector<1x64x64xbf16> to vector<64x64xbf16>
    %cst_38 = arith.constant dense<0.000000e+00> : vector<16x64xf32>
    %82 = tpu.matmul %79, %81, %cst_38 {dimension_numbers = #tpu.dot_dimension_numbers<[1], [0], [0], [1], [0, 0, 1, 1], [], []>} : vector<16x64xbf16>, vector<64x64xbf16>, vector<16x64xf32> -> vector<16x64xf32>
    %c0_39 = arith.constant 0 : index
    %c0_40 = arith.constant 0 : index
    %c0_41 = arith.constant 0 : index
    %83 = vector.load %arg8[%c0_39, %c0_40, %c0_41] : memref<1x1x64xf32, #tpu.memory_space<vmem>>, vector<1x1x64xf32>
    %84 = vector.shape_cast %83 : vector<1x1x64xf32> to vector<1x64xf32>
    %cst_42 = arith.constant dense<0.000000e+00> : vector<16xf32>
    %85 = vector.multi_reduction <add>, %82, %cst_42 [1] : vector<16x64xf32> to vector<16xf32>
    %86 = vector.shape_cast %85 : vector<16xf32> to vector<16x1xf32>
    %87 = arith.mulf %82, %82 : vector<16x64xf32>
    %cst_43 = arith.constant dense<0.000000e+00> : vector<16xf32>
    %88 = vector.multi_reduction <add>, %87, %cst_43 [1] : vector<16x64xf32> to vector<16xf32>
    %89 = vector.shape_cast %88 : vector<16xf32> to vector<16x1xf32>
    %cst_44 = arith.constant 1.562500e-02 : f32
    %90 = vector.broadcast %cst_44 : f32 to vector<16x1xf32>
    %91 = arith.mulf %86, %90 : vector<16x1xf32>
    %cst_45 = arith.constant 1.562500e-02 : f32
    %92 = vector.broadcast %cst_45 : f32 to vector<16x1xf32>
    %93 = arith.mulf %89, %92 : vector<16x1xf32>
    %94 = arith.mulf %91, %91 : vector<16x1xf32>
    %95 = arith.subf %93, %94 : vector<16x1xf32>
    %cst_46 = arith.constant 0.000000e+00 : f32
    %96 = vector.broadcast %cst_46 : f32 to vector<16x1xf32>
    %97 = arith.maximumf %95, %96 : vector<16x1xf32>
    %98 = vector.broadcast %91 : vector<16x1xf32> to vector<16x64xf32>
    %99 = arith.subf %82, %98 : vector<16x64xf32>
    %cst_47 = arith.constant 9.99999974E-6 : f32
    %100 = vector.broadcast %cst_47 : f32 to vector<16x1xf32>
    %101 = arith.addf %97, %100 : vector<16x1xf32>
    %102 = math.rsqrt %101 : vector<16x1xf32>
    %103 = vector.broadcast %102 : vector<16x1xf32> to vector<16x64xf32>
    %104 = arith.mulf %99, %103 : vector<16x64xf32>
    %105 = vector.broadcast %84 : vector<1x64xf32> to vector<16x64xf32>
    %106 = arith.mulf %104, %105 : vector<16x64xf32>
    %107 = arith.addf %3, %106 : vector<16x64xf32>
    %c0_48 = arith.constant 0 : index
    %c0_49 = arith.constant 0 : index
    %c0_50 = arith.constant 0 : index
    %108 = vector.load %arg9[%c0_48, %c0_49, %c0_50] : memref<1x1x64xf32, #tpu.memory_space<vmem>>, vector<1x1x64xf32>
    %109 = vector.shape_cast %108 : vector<1x1x64xf32> to vector<1x64xf32>
    %cst_51 = arith.constant dense<0.000000e+00> : vector<16xf32>
    %110 = vector.multi_reduction <add>, %107, %cst_51 [1] : vector<16x64xf32> to vector<16xf32>
    %111 = vector.shape_cast %110 : vector<16xf32> to vector<16x1xf32>
    %112 = arith.mulf %107, %107 : vector<16x64xf32>
    %cst_52 = arith.constant dense<0.000000e+00> : vector<16xf32>
    %113 = vector.multi_reduction <add>, %112, %cst_52 [1] : vector<16x64xf32> to vector<16xf32>
    %114 = vector.shape_cast %113 : vector<16xf32> to vector<16x1xf32>
    %cst_53 = arith.constant 1.562500e-02 : f32
    %115 = vector.broadcast %cst_53 : f32 to vector<16x1xf32>
    %116 = arith.mulf %111, %115 : vector<16x1xf32>
    %cst_54 = arith.constant 1.562500e-02 : f32
    %117 = vector.broadcast %cst_54 : f32 to vector<16x1xf32>
    %118 = arith.mulf %114, %117 : vector<16x1xf32>
    %119 = arith.mulf %116, %116 : vector<16x1xf32>
    %120 = arith.subf %118, %119 : vector<16x1xf32>
    %cst_55 = arith.constant 0.000000e+00 : f32
    %121 = vector.broadcast %cst_55 : f32 to vector<16x1xf32>
    %122 = arith.maximumf %120, %121 : vector<16x1xf32>
    %123 = vector.broadcast %116 : vector<16x1xf32> to vector<16x64xf32>
    %124 = arith.subf %107, %123 : vector<16x64xf32>
    %cst_56 = arith.constant 9.99999974E-6 : f32
    %125 = vector.broadcast %cst_56 : f32 to vector<16x1xf32>
    %126 = arith.addf %122, %125 : vector<16x1xf32>
    %127 = math.rsqrt %126 : vector<16x1xf32>
    %128 = vector.broadcast %127 : vector<16x1xf32> to vector<16x64xf32>
    %129 = arith.mulf %124, %128 : vector<16x64xf32>
    %130 = vector.broadcast %109 : vector<1x64xf32> to vector<16x64xf32>
    %131 = arith.mulf %129, %130 : vector<16x64xf32>
    %132 = arith.truncf %131 : vector<16x64xf32> to vector<16x64xbf16>
    %c0_57 = arith.constant 0 : index
    %c0_58 = arith.constant 0 : index
    %c0_59 = arith.constant 0 : index
    %133 = vector.load %arg10[%c0_57, %c0_58, %c0_59] : memref<1x64x256xbf16, #tpu.memory_space<vmem>>, vector<1x64x256xbf16>
    %134 = vector.shape_cast %133 : vector<1x64x256xbf16> to vector<64x256xbf16>
    %cst_60 = arith.constant dense<0.000000e+00> : vector<16x256xf32>
    %135 = tpu.matmul %132, %134, %cst_60 {dimension_numbers = #tpu.dot_dimension_numbers<[1], [0], [0], [1], [0, 0, 1, 1], [], []>} : vector<16x64xbf16>, vector<64x256xbf16>, vector<16x256xf32> -> vector<16x256xf32>
    %c0_61 = arith.constant 0 : index
    %c0_62 = arith.constant 0 : index
    %c0_63 = arith.constant 0 : index
    %136 = vector.load %arg11[%c0_61, %c0_62, %c0_63] : memref<1x64x256xbf16, #tpu.memory_space<vmem>>, vector<1x64x256xbf16>
    %137 = vector.shape_cast %136 : vector<1x64x256xbf16> to vector<64x256xbf16>
    %cst_64 = arith.constant dense<0.000000e+00> : vector<16x256xf32>
    %138 = tpu.matmul %132, %137, %cst_64 {dimension_numbers = #tpu.dot_dimension_numbers<[1], [0], [0], [1], [0, 0, 1, 1], [], []>} : vector<16x64xbf16>, vector<64x256xbf16>, vector<16x256xf32> -> vector<16x256xf32>
    %139 = arith.negf %138 : vector<16x256xf32>
    %140 = math.exp %139 : vector<16x256xf32>
    %cst_65 = arith.constant 1.000000e+00 : f32
    %141 = vector.broadcast %cst_65 : f32 to vector<16x256xf32>
    %142 = arith.addf %141, %140 : vector<16x256xf32>
    %143 = arith.divf %141, %142 : vector<16x256xf32>
    %144 = arith.mulf %138, %143 : vector<16x256xf32>
    %145 = arith.mulf %135, %144 : vector<16x256xf32>
    %c0_66 = arith.constant 0 : index
    %c0_67 = arith.constant 0 : index
    %c0_68 = arith.constant 0 : index
    %146 = vector.load %arg12[%c0_66, %c0_67, %c0_68] : memref<1x1x256xf32, #tpu.memory_space<vmem>>, vector<1x1x256xf32>
    %147 = vector.shape_cast %146 : vector<1x1x256xf32> to vector<1x256xf32>
    %cst_69 = arith.constant dense<0.000000e+00> : vector<16xf32>
    %148 = vector.multi_reduction <add>, %145, %cst_69 [1] : vector<16x256xf32> to vector<16xf32>
    %149 = vector.shape_cast %148 : vector<16xf32> to vector<16x1xf32>
    %150 = arith.mulf %145, %145 : vector<16x256xf32>
    %cst_70 = arith.constant dense<0.000000e+00> : vector<16xf32>
    %151 = vector.multi_reduction <add>, %150, %cst_70 [1] : vector<16x256xf32> to vector<16xf32>
    %152 = vector.shape_cast %151 : vector<16xf32> to vector<16x1xf32>
    %cst_71 = arith.constant 3.906250e-03 : f32
    %153 = vector.broadcast %cst_71 : f32 to vector<16x1xf32>
    %154 = arith.mulf %149, %153 : vector<16x1xf32>
    %cst_72 = arith.constant 3.906250e-03 : f32
    %155 = vector.broadcast %cst_72 : f32 to vector<16x1xf32>
    %156 = arith.mulf %152, %155 : vector<16x1xf32>
    %157 = arith.mulf %154, %154 : vector<16x1xf32>
    %158 = arith.subf %156, %157 : vector<16x1xf32>
    %cst_73 = arith.constant 0.000000e+00 : f32
    %159 = vector.broadcast %cst_73 : f32 to vector<16x1xf32>
    %160 = arith.maximumf %158, %159 : vector<16x1xf32>
    %161 = vector.broadcast %154 : vector<16x1xf32> to vector<16x256xf32>
    %162 = arith.subf %145, %161 : vector<16x256xf32>
    %cst_74 = arith.constant 9.99999974E-6 : f32
    %163 = vector.broadcast %cst_74 : f32 to vector<16x1xf32>
    %164 = arith.addf %160, %163 : vector<16x1xf32>
    %165 = math.rsqrt %164 : vector<16x1xf32>
    %166 = vector.broadcast %165 : vector<16x1xf32> to vector<16x256xf32>
    %167 = arith.mulf %162, %166 : vector<16x256xf32>
    %168 = vector.broadcast %147 : vector<1x256xf32> to vector<16x256xf32>
    %169 = arith.mulf %167, %168 : vector<16x256xf32>
    %170 = arith.truncf %169 : vector<16x256xf32> to vector<16x256xbf16>
    %c0_75 = arith.constant 0 : index
    %c0_76 = arith.constant 0 : index
    %c0_77 = arith.constant 0 : index
    %171 = vector.load %arg13[%c0_75, %c0_76, %c0_77] : memref<1x256x64xbf16, #tpu.memory_space<vmem>>, vector<1x256x64xbf16>
    %172 = vector.shape_cast %171 : vector<1x256x64xbf16> to vector<256x64xbf16>
    %cst_78 = arith.constant dense<0.000000e+00> : vector<16x64xf32>
    %173 = tpu.matmul %170, %172, %cst_78 {dimension_numbers = #tpu.dot_dimension_numbers<[1], [0], [0], [1], [0, 0, 1, 1], [], []>} : vector<16x256xbf16>, vector<256x64xbf16>, vector<16x64xf32> -> vector<16x64xf32>
    %174 = arith.addf %107, %173 : vector<16x64xf32>
    %c1_i32 = arith.constant 1 : i32
    %175 = arith.cmpi slt, %arg0, %c1_i32 : i32
    %176 = arith.extui %175 : i1 to i32
    %c0_i32_79 = arith.constant 0 : i32
    %177 = arith.cmpi ne, %176, %c0_i32_79 : i32
    scf.if %177 {
      %c0_82 = arith.constant 0 : index
      %c0_83 = arith.constant 0 : index
      %181 = vector.load %arg14[%c0_82, %c0_83] : memref<16x64xf32, #tpu.memory_space<vmem>>, vector<16x64xf32>
      tpu.vector_store %arg14[%c0_82, %c0_83], %174 {strides = array<i32>} : memref<16x64xf32, #tpu.memory_space<vmem>>, vector<16x64xf32>,
    } else {
    }
    %c1_i32_80 = arith.constant 1 : i32
    %178 = arith.cmpi eq, %arg0, %c1_i32_80 : i32
    %179 = arith.extui %178 : i1 to i32
    %c0_i32_81 = arith.constant 0 : i32
    %180 = arith.cmpi ne, %179, %c0_i32_81 : i32
    scf.if %180 {
      %c0_82 = arith.constant 0 : index
      %c0_83 = arith.constant 0 : index
      %181 = vector.load %arg2[%c0_82, %c0_83] : memref<1x64xf32, #tpu.memory_space<vmem>>, vector<1x64xf32>
      %cst_84 = arith.constant dense<0.000000e+00> : vector<16xf32>
      %182 = vector.multi_reduction <add>, %174, %cst_84 [1] : vector<16x64xf32> to vector<16xf32>
      %183 = vector.shape_cast %182 : vector<16xf32> to vector<16x1xf32>
      %184 = arith.mulf %174, %174 : vector<16x64xf32>
      %cst_85 = arith.constant dense<0.000000e+00> : vector<16xf32>
      %185 = vector.multi_reduction <add>, %184, %cst_85 [1] : vector<16x64xf32> to vector<16xf32>
      %186 = vector.shape_cast %185 : vector<16xf32> to vector<16x1xf32>
      %cst_86 = arith.constant 1.562500e-02 : f32
      %187 = vector.broadcast %cst_86 : f32 to vector<16x1xf32>
      %188 = arith.mulf %183, %187 : vector<16x1xf32>
      %cst_87 = arith.constant 1.562500e-02 : f32
      %189 = vector.broadcast %cst_87 : f32 to vector<16x1xf32>
      %190 = arith.mulf %186, %189 : vector<16x1xf32>
      %191 = arith.mulf %188, %188 : vector<16x1xf32>
      %192 = arith.subf %190, %191 : vector<16x1xf32>
      %cst_88 = arith.constant 0.000000e+00 : f32
      %193 = vector.broadcast %cst_88 : f32 to vector<16x1xf32>
      %194 = arith.maximumf %192, %193 : vector<16x1xf32>
      %195 = vector.broadcast %188 : vector<16x1xf32> to vector<16x64xf32>
      %196 = arith.subf %174, %195 : vector<16x64xf32>
      %cst_89 = arith.constant 9.99999974E-6 : f32
      %197 = vector.broadcast %cst_89 : f32 to vector<16x1xf32>
      %198 = arith.addf %194, %197 : vector<16x1xf32>
      %199 = math.rsqrt %198 : vector<16x1xf32>
      %200 = vector.broadcast %199 : vector<16x1xf32> to vector<16x64xf32>
      %201 = arith.mulf %196, %200 : vector<16x64xf32>
      %202 = vector.broadcast %181 : vector<1x64xf32> to vector<16x64xf32>
      %203 = arith.mulf %201, %202 : vector<16x64xf32>
      %c0_90 = arith.constant 0 : index
      %c0_91 = arith.constant 0 : index
      %204 = vector.load %arg14[%c0_90, %c0_91] : memref<16x64xf32, #tpu.memory_space<vmem>>, vector<16x64xf32>
      tpu.vector_store %arg14[%c0_90, %c0_91], %203 {strides = array<i32>} : memref<16x64xf32, #tpu.memory_space<vmem>>, vector<16x64xf32>,
    } else {
    }
    return
  }
  func.func @transform_1(%arg0: i32) -> (i32, i32) {
    %c0_i32 = arith.constant 0 : i32
    %c0_i32_0 = arith.constant 0 : i32
    %c0_i32_1 = arith.constant 0 : i32
    return %c0_i32, %c0_i32_0 : i32, i32
  }
  func.func @transform_2(%arg0: i32) -> (i32, i32, i32) {
    %c0_i32 = arith.constant 0 : i32
    %c0_i32_0 = arith.constant 0 : i32
    %c0_i32_1 = arith.constant 0 : i32
    return %arg0, %c0_i32, %c0_i32_0 : i32, i32, i32
  }
  func.func @transform_3(%arg0: i32) -> (i32, i32, i32) {
    %c0_i32 = arith.constant 0 : i32
    %c0_i32_0 = arith.constant 0 : i32
    %c0_i32_1 = arith.constant 0 : i32
    return %arg0, %c0_i32, %c0_i32_0 : i32, i32, i32
  }
  func.func @transform_4(%arg0: i32) -> (i32, i32, i32) {
    %c0_i32 = arith.constant 0 : i32
    %c0_i32_0 = arith.constant 0 : i32
    %c0_i32_1 = arith.constant 0 : i32
    return %arg0, %c0_i32, %c0_i32_0 : i32, i32, i32
  }
  func.func @transform_5(%arg0: i32) -> (i32, i32, i32) {
    %c0_i32 = arith.constant 0 : i32
    %c0_i32_0 = arith.constant 0 : i32
    %c0_i32_1 = arith.constant 0 : i32
    return %arg0, %c0_i32, %c0_i32_0 : i32, i32, i32
  }
  func.func @transform_6(%arg0: i32) -> (i32, i32, i32) {
    %c0_i32 = arith.constant 0 : i32
    %c0_i32_0 = arith.constant 0 : i32
    %c0_i32_1 = arith.constant 0 : i32
    return %arg0, %c0_i32, %c0_i32_0 : i32, i32, i32
  }
  func.func @transform_7(%arg0: i32) -> (i32, i32, i32) {
    %c0_i32 = arith.constant 0 : i32
    %c0_i32_0 = arith.constant 0 : i32
    %c0_i32_1 = arith.constant 0 : i32
    return %arg0, %c0_i32, %c0_i32_0 : i32, i32, i32
  }
  func.func @transform_8(%arg0: i32) -> (i32, i32, i32) {
    %c0_i32 = arith.constant 0 : i32
    %c0_i32_0 = arith.constant 0 : i32
    %c0_i32_1 = arith.constant 0 : i32
    return %arg0, %c0_i32, %c0_i32_0 : i32, i32, i32
  }
  func.func @transform_9(%arg0: i32) -> (i32, i32, i32) {
    %c0_i32 = arith.constant 0 : i32
    %c0_i32_0 = arith.constant 0 : i32
    %c0_i32_1 = arith.constant 0 : i32
    return %arg0, %c0_i32, %c0_i32_0 : i32, i32, i32
  }
  func.func @transform_10(%arg0: i32) -> (i32, i32, i32) {
    %c0_i32 = arith.constant 0 : i32
    %c0_i32_0 = arith.constant 0 : i32
    %c0_i32_1 = arith.constant 0 : i32
    return %arg0, %c0_i32, %c0_i32_0 : i32, i32, i32
  }
  func.func @transform_11(%arg0: i32) -> (i32, i32, i32) {
    %c0_i32 = arith.constant 0 : i32
    %c0_i32_0 = arith.constant 0 : i32
    %c0_i32_1 = arith.constant 0 : i32
    return %arg0, %c0_i32, %c0_i32_0 : i32, i32, i32
  }
  func.func @transform_12(%arg0: i32) -> (i32, i32, i32) {
    %c0_i32 = arith.constant 0 : i32
    %c0_i32_0 = arith.constant 0 : i32
    %c0_i32_1 = arith.constant 0 : i32
    return %arg0, %c0_i32, %c0_i32_0 : i32, i32, i32
  }
  func.func @transform_13(%arg0: i32) -> (i32, i32) {
    %c0_i32 = arith.constant 0 : i32
    %c0_i32_0 = arith.constant 0 : i32
    %c0_i32_1 = arith.constant 0 : i32
    return %c0_i32, %c0_i32_0 : i32, i32
  }
}

</mosaic_0001>

<llo_original>
// kernel: text_transformer_forward.1
$region0: #{text_transformer_forward.1}
  #allocation0 [shape = 'u32[]', space=smem, size = 0x4, offset = 0x4, fixed_abs, tag = 'smem constant byte address 0x4 - core index']
  #allocation1 [shape = 'u32[144,128]{1,0:T(1,128)}', space=vmem, size = 0x12000, scoped, tag = 'internal scratch']
  #allocation2 [shape = 'f32[16,64]{1,0:T(8,128)}', space=vmem, size = 0x2000, scoped, tag = 'scratch operand']
  #allocation6 [shape = 's32[]', space=sflag, size = 0x4, offset = 0, fixed_abs, tag = 'sflag constant byte address 0x0 - dummy sync flag']
  %s0 = inlined_call_operand.vmem [shape: f32[16,64], index: 0, kind: input, shape index: {}]
  %s1 = inlined_call_operand.vmem [shape: f32[1,64], index: 1, kind: input, shape index: {}]
  %s2 = inlined_call_operand.vmem [shape: f32[2,1,64], index: 2, kind: input, shape index: {}]
  %s3 = inlined_call_operand.vmem [shape: bf16[2,64,64], index: 3, kind: input, shape index: {}]
  %s4 = inlined_call_operand.vmem [shape: bf16[2,64,64], index: 4, kind: input, shape index: {}]
  %s5 = inlined_call_operand.vmem [shape: bf16[2,64,64], index: 5, kind: input, shape index: {}]
  %s6 = inlined_call_operand.vmem [shape: bf16[2,64,64], index: 6, kind: input, shape index: {}]
  %s7 = inlined_call_operand.vmem [shape: f32[2,1,64], index: 7, kind: input, shape index: {}]
  %s8 = inlined_call_operand.vmem [shape: f32[2,1,64], index: 8, kind: input, shape index: {}]
  %s9 = inlined_call_operand.vmem [shape: bf16[2,64,256], index: 9, kind: input, shape index: {}]
  %s10 = inlined_call_operand.vmem [shape: bf16[2,64,256], index: 10, kind: input, shape index: {}]
  %s11 = inlined_call_operand.vmem [shape: f32[2,1,256], index: 11, kind: input, shape index: {}]
  %s12 = inlined_call_operand.vmem [shape: bf16[2,256,64], index: 12, kind: input, shape index: {}]
  %s13 = inlined_call_operand.hbm [shape: f32[16,64], index: 13, kind: output, shape index: {}]
  %s14 = sld [smem:[#allocation0]]
  $region128: #{text_transformer_forward.1} parent=0
    _
  %s16 = ssub.s32 1, %s14
  %s17 = scalar_select 0, %s16, %s14
  $region1: #{text_transformer_forward.1} parent=0
    #allocation3 [shape = 'u8[8192]{0}', space=vmem, size = 0x2000, scoped, tag = 'output window, operand 0, single buffered']
    #allocation4 [shape = 's32[2]{0}', space=sflag, size = 0x8, scoped, tag = 'scoped memory for text_transformer_forward.1']
    %18 = vsyncpa [#allocation4], 0
    loop: start=0, step=1, limit=4
    $region2: #{text_transformer_forward.1} parent=1 // loop_pre_header
      _
    $region3: #{text_transformer_forward.1} parent=1 // loop_header
      %s20 = sphi 0, %s24
      %p21 = scmp.ge.s32.totalorder %s20, 4
      %s28 = sphi 0, %s28
      %s30 = sphi 0, %s28
      %s31 = sphi 0, %s30
      %s45 = sphi 0, %s31
      %s51 = sphi 0, %s53
      %s54 = sphi 0, %s51
      %s55 = sphi 0, %s54
      %s71 = sphi 0, %s55
      %s77 = sphi 0, %s79
      %s80 = sphi 0, %s77
      %s81 = sphi 0, %s80
      %s97 = sphi 0, %s81
      %s103 = sphi 0, %s105
      %s106 = sphi 0, %s103
      %s107 = sphi 0, %s106
      %s123 = sphi 0, %s107
      %s129 = sphi 0, %s131
      %s132 = sphi 0, %s129
      %s133 = sphi 0, %s132
      %s149 = sphi 0, %s133
      %s155 = sphi 0, %s157
      %s158 = sphi 0, %s155
      %s159 = sphi 0, %s158
      %s175 = sphi 0, %s159
      %s181 = sphi 0, %s183
      %s184 = sphi 0, %s181
      %s185 = sphi 0, %s184
      %s201 = sphi 0, %s185
      %s207 = sphi 0, %s209
      %s210 = sphi 0, %s207
      %s211 = sphi 0, %s210
      %s227 = sphi 0, %s211
      %s233 = sphi 0, %s235
      %s236 = sphi 0, %s233
      %s237 = sphi 0, %s236
      %s253 = sphi 0, %s237
      %s259 = sphi 0, %s261
      %s262 = sphi 0, %s259
      %s263 = sphi 0, %s262
      %s279 = sphi 0, %s263
      %s285 = sphi 0, %s287
      %s288 = sphi 0, %s285
      %s289 = sphi 0, %s288
      %s305 = sphi 0, %s289
      %s311 = sphi 0, %s313
      %s314 = sphi 0, %s311
      %s315 = sphi 0, %s314
      %s331 = sphi 0, %s315
      %s335 = sphi 0, %s335
      %s337 = sphi 0, %s335
      %s338 = sphi 0, %s337
      %s352 = sphi 0, %s338
    $region4: #{text_transformer_forward.1} parent=1 // loop_header_branch
      %23 = sbr.rel (%p21) target = $region8
    $region5: #{text_transformer_forward.1} parent=1 // loop_body
      %s25 = ssub.s32 %s20, 1
      %s26 = ssub.s32 %s20, 2
      %s27 = sadd.s32 %s20, 1
      %s29 = sadd.s32 %s28, 1
      %p32 = scmp.eq.s32.totalorder %s20, 1
      %p33 = scmp.ne.s32.totalorder %s28, %s30
      %p34 = scmp.eq.s32.totalorder %s20, 0
      %p35 = por %p33, %p34
      %p36 = scmp.ne.s32.totalorder %s28, %s30
      %p37 = scmp.eq.s32.totalorder %s25, 1
      %p38 = por %p36, %p37
      %p39 = scmp.ne.s32.totalorder %s30, %s31
      %p40 = scmp.eq.s32.totalorder %s25, 0
      %p41 = por %p39, %p40
      %p42 = scmp.ne.s32.totalorder %s30, %s31
      %p43 = scmp.eq.s32.totalorder %s26, 1
      %p44 = por %p42, %p43
      %p46 = scmp.ne.s32.totalorder %s31, %s45
      %p47 = scmp.eq.s32.totalorder %s26, 0
      %p48 = por %p46, %p47
      %s49 = ssub.s32 %s20, %s27
      %p50 = scmp.eq.s32.totalorder %s49, 0
      %s52 = sadd.s32 %s51, 1
      %s53 = scalar_select %p50, %s51, %s52
      %p56 = pneg %p50
      %p57 = scmp.eq.s32.totalorder %s20, 1
      %p58 = por %p56, %p57
      %p59 = scmp.ne.s32.totalorder %s51, %s54
      %p60 = scmp.eq.s32.totalorder %s20, 0
      %p61 = por %p59, %p60
      %p62 = scmp.ne.s32.totalorder %s51, %s54
      %p63 = scmp.eq.s32.totalorder %s25, 1
      %p64 = por %p62, %p63
      %p65 = scmp.ne.s32.totalorder %s54, %s55
      %p66 = scmp.eq.s32.totalorder %s25, 0
      %p67 = por %p65, %p66
      %p68 = scmp.ne.s32.totalorder %s54, %s55
      %p69 = scmp.eq.s32.totalorder %s26, 1
      %p70 = por %p68, %p69
      %p72 = scmp.ne.s32.totalorder %s55, %s71
      %p73 = scmp.eq.s32.totalorder %s26, 0
      %p74 = por %p72, %p73
      %s75 = ssub.s32 %s20, %s27
      %p76 = scmp.eq.s32.totalorder %s75, 0
      %s78 = sadd.s32 %s77, 1
      %s79 = scalar_select %p76, %s77, %s78
      %p82 = pneg %p76
      %p83 = scmp.eq.s32.totalorder %s20, 1
      %p84 = por %p82, %p83
      %p85 = scmp.ne.s32.totalorder %s77, %s80
      %p86 = scmp.eq.s32.totalorder %s20, 0
      %p87 = por %p85, %p86
      %p88 = scmp.ne.s32.totalorder %s77, %s80
      %p89 = scmp.eq.s32.totalorder %s25, 1
      %p90 = por %p88, %p89
      %p91 = scmp.ne.s32.totalorder %s80, %s81
      %p92 = scmp.eq.s32.totalorder %s25, 0
      %p93 = por %p91, %p92
      %p94 = scmp.ne.s32.totalorder %s80, %s81
      %p95 = scmp.eq.s32.totalorder %s26, 1
      %p96 = por %p94, %p95
      %p98 = scmp.ne.s32.totalorder %s81, %s97
      %p99 = scmp.eq.s32.totalorder %s26, 0
      %p100 = por %p98, %p99
      %s101 = ssub.s32 %s20, %s27
      %p102 = scmp.eq.s32.totalorder %s101, 0
      %s104 = sadd.s32 %s103, 1
      %s105 = scalar_select %p102, %s103, %s104
      %p108 = pneg %p102
      %p109 = scmp.eq.s32.totalorder %s20, 1
      %p110 = por %p108, %p109
      %p111 = scmp.ne.s32.totalorder %s103, %s106
      %p112 = scmp.eq.s32.totalorder %s20, 0
      %p113 = por %p111, %p112
      %p114 = scmp.ne.s32.totalorder %s103, %s106
      %p115 = scmp.eq.s32.totalorder %s25, 1
      %p116 = por %p114, %p115
      %p117 = scmp.ne.s32.totalorder %s106, %s107
      %p118 = scmp.eq.s32.totalorder %s25, 0
      %p119 = por %p117, %p118
      %p120 = scmp.ne.s32.totalorder %s106, %s107
      %p121 = scmp.eq.s32.totalorder %s26, 1
      %p122 = por %p120, %p121
      %p124 = scmp.ne.s32.totalorder %s107, %s123
      %p125 = scmp.eq.s32.totalorder %s26, 0
      %p126 = por %p124, %p125
      %s127 = ssub.s32 %s20, %s27
      %p128 = scmp.eq.s32.totalorder %s127, 0
      %s130 = sadd.s32 %s129, 1
      %s131 = scalar_select %p128, %s129, %s130
      %p134 = pneg %p128
      %p135 = scmp.eq.s32.totalorder %s20, 1
      %p136 = por %p134, %p135
      %p137 = scmp.ne.s32.totalorder %s129, %s132
      %p138 = scmp.eq.s32.totalorder %s20, 0
      %p139 = por %p137, %p138
      %p140 = scmp.ne.s32.totalorder %s129, %s132
      %p141 = scmp.eq.s32.totalorder %s25, 1
      %p142 = por %p140, %p141
      %p143 = scmp.ne.s32.totalorder %s132, %s133
      %p144 = scmp.eq.s32.totalorder %s25, 0
      %p145 = por %p143, %p144
      %p146 = scmp.ne.s32.totalorder %s132, %s133
      %p147 = scmp.eq.s32.totalorder %s26, 1
      %p148 = por %p146, %p147
      %p150 = scmp.ne.s32.totalorder %s133, %s149
      %p151 = scmp.eq.s32.totalorder %s26, 0
      %p152 = por %p150, %p151
      %s153 = ssub.s32 %s20, %s27
      %p154 = scmp.eq.s32.totalorder %s153, 0
      %s156 = sadd.s32 %s155, 1
      %s157 = scalar_select %p154, %s155, %s156
      %p160 = pneg %p154
      %p161 = scmp.eq.s32.totalorder %s20, 1
      %p162 = por %p160, %p161
      %p163 = scmp.ne.s32.totalorder %s155, %s158
      %p164 = scmp.eq.s32.totalorder %s20, 0
      %p165 = por %p163, %p164
      %p166 = scmp.ne.s32.totalorder %s155, %s158
      %p167 = scmp.eq.s32.totalorder %s25, 1
      %p168 = por %p166, %p167
      %p169 = scmp.ne.s32.totalorder %s158, %s159
      %p170 = scmp.eq.s32.totalorder %s25, 0
      %p171 = por %p169, %p170
      %p172 = scmp.ne.s32.totalorder %s158, %s159
      %p173 = scmp.eq.s32.totalorder %s26, 1
      %p174 = por %p172, %p173
      %p176 = scmp.ne.s32.totalorder %s159, %s175
      %p177 = scmp.eq.s32.totalorder %s26, 0
      %p178 = por %p176, %p177
      %s179 = ssub.s32 %s20, %s27
      %p180 = scmp.eq.s32.totalorder %s179, 0
      %s182 = sadd.s32 %s181, 1
      %s183 = scalar_select %p180, %s181, %s182
      %p186 = pneg %p180
      %p187 = scmp.eq.s32.totalorder %s20, 1
      %p188 = por %p186, %p187
      %p189 = scmp.ne.s32.totalorder %s181, %s184
      %p190 = scmp.eq.s32.totalorder %s20, 0
      %p191 = por %p189, %p190
      %p192 = scmp.ne.s32.totalorder %s181, %s184
      %p193 = scmp.eq.s32.totalorder %s25, 1
      %p194 = por %p192, %p193
      %p195 = scmp.ne.s32.totalorder %s184, %s185
      %p196 = scmp.eq.s32.totalorder %s25, 0
      %p197 = por %p195, %p196
      %p198 = scmp.ne.s32.totalorder %s184, %s185
      %p199 = scmp.eq.s32.totalorder %s26, 1
      %p200 = por %p198, %p199
      %p202 = scmp.ne.s32.totalorder %s185, %s201
      %p203 = scmp.eq.s32.totalorder %s26, 0
      %p204 = por %p202, %p203
      %s205 = ssub.s32 %s20, %s27
      %p206 = scmp.eq.s32.totalorder %s205, 0
      %s208 = sadd.s32 %s207, 1
      %s209 = scalar_select %p206, %s207, %s208
      %p212 = pneg %p206
      %p213 = scmp.eq.s32.totalorder %s20, 1
      %p214 = por %p212, %p213
      %p215 = scmp.ne.s32.totalorder %s207, %s210
      %p216 = scmp.eq.s32.totalorder %s20, 0
      %p217 = por %p215, %p216
      %p218 = scmp.ne.s32.totalorder %s207, %s210
      %p219 = scmp.eq.s32.totalorder %s25, 1
      %p220 = por %p218, %p219
      %p221 = scmp.ne.s32.totalorder %s210, %s211
      %p222 = scmp.eq.s32.totalorder %s25, 0
      %p223 = por %p221, %p222
      %p224 = scmp.ne.s32.totalorder %s210, %s211
      %p225 = scmp.eq.s32.totalorder %s26, 1
      %p226 = por %p224, %p225
      %p228 = scmp.ne.s32.totalorder %s211, %s227
      %p229 = scmp.eq.s32.totalorder %s26, 0
      %p230 = por %p228, %p229
      %s231 = ssub.s32 %s20, %s27
      %p232 = scmp.eq.s32.totalorder %s231, 0
      %s234 = sadd.s32 %s233, 1
      %s235 = scalar_select %p232, %s233, %s234
      %p238 = pneg %p232
      %p239 = scmp.eq.s32.totalorder %s20, 1
      %p240 = por %p238, %p239
      %p241 = scmp.ne.s32.totalorder %s233, %s236
      %p242 = scmp.eq.s32.totalorder %s20, 0
      %p243 = por %p241, %p242
      %p244 = scmp.ne.s32.totalorder %s233, %s236
      %p245 = scmp.eq.s32.totalorder %s25, 1
      %p246 = por %p244, %p245
      %p247 = scmp.ne.s32.totalorder %s236, %s237
      %p248 = scmp.eq.s32.totalorder %s25, 0
      %p249 = por %p247, %p248
      %p250 = scmp.ne.s32.totalorder %s236, %s237
      %p251 = scmp.eq.s32.totalorder %s26, 1
      %p252 = por %p250, %p251
      %p254 = scmp.ne.s32.totalorder %s237, %s253
      %p255 = scmp.eq.s32.totalorder %s26, 0
      %p256 = por %p254, %p255
      %s257 = ssub.s32 %s20, %s27
      %p258 = scmp.eq.s32.totalorder %s257, 0
      %s260 = sadd.s32 %s259, 1
      %s261 = scalar_select %p258, %s259, %s260
      %p264 = pneg %p258
      %p265 = scmp.eq.s32.totalorder %s20, 1
      %p266 = por %p264, %p265
      %p267 = scmp.ne.s32.totalorder %s259, %s262
      %p268 = scmp.eq.s32.totalorder %s20, 0
      %p269 = por %p267, %p268
      %p270 = scmp.ne.s32.totalorder %s259, %s262
      %p271 = scmp.eq.s32.totalorder %s25, 1
      %p272 = por %p270, %p271
      %p273 = scmp.ne.s32.totalorder %s262, %s263
      %p274 = scmp.eq.s32.totalorder %s25, 0
      %p275 = por %p273, %p274
      %p276 = scmp.ne.s32.totalorder %s262, %s263
      %p277 = scmp.eq.s32.totalorder %s26, 1
      %p278 = por %p276, %p277
      %p280 = scmp.ne.s32.totalorder %s263, %s279
      %p281 = scmp.eq.s32.totalorder %s26, 0
      %p282 = por %p280, %p281
      %s283 = ssub.s32 %s20, %s27
      %p284 = scmp.eq.s32.totalorder %s283, 0
      %s286 = sadd.s32 %s285, 1
      %s287 = scalar_select %p284, %s285, %s286
      %p290 = pneg %p284
      %p291 = scmp.eq.s32.totalorder %s20, 1
      %p292 = por %p290, %p291
      %p293 = scmp.ne.s32.totalorder %s285, %s288
      %p294 = scmp.eq.s32.totalorder %s20, 0
      %p295 = por %p293, %p294
      %p296 = scmp.ne.s32.totalorder %s285, %s288
      %p297 = scmp.eq.s32.totalorder %s25, 1
      %p298 = por %p296, %p297
      %p299 = scmp.ne.s32.totalorder %s288, %s289
      %p300 = scmp.eq.s32.totalorder %s25, 0
      %p301 = por %p299, %p300
      %p302 = scmp.ne.s32.totalorder %s288, %s289
      %p303 = scmp.eq.s32.totalorder %s26, 1
      %p304 = por %p302, %p303
      %p306 = scmp.ne.s32.totalorder %s289, %s305
      %p307 = scmp.eq.s32.totalorder %s26, 0
      %p308 = por %p306, %p307
      %s309 = ssub.s32 %s20, %s27
      %p310 = scmp.eq.s32.totalorder %s309, 0
      %s312 = sadd.s32 %s311, 1
      %s313 = scalar_select %p310, %s311, %s312
      %p316 = pneg %p310
      %p317 = scmp.eq.s32.totalorder %s20, 1
      %p318 = por %p316, %p317
      %p319 = scmp.ne.s32.totalorder %s311, %s314
      %p320 = scmp.eq.s32.totalorder %s20, 0
      %p321 = por %p319, %p320
      %p322 = scmp.ne.s32.totalorder %s311, %s314
      %p323 = scmp.eq.s32.totalorder %s25, 1
      %p324 = por %p322, %p323
      %p325 = scmp.ne.s32.totalorder %s314, %s315
      %p326 = scmp.eq.s32.totalorder %s25, 0
      %p327 = por %p325, %p326
      %p328 = scmp.ne.s32.totalorder %s314, %s315
      %p329 = scmp.eq.s32.totalorder %s26, 1
      %p330 = por %p328, %p329
      %p332 = scmp.ne.s32.totalorder %s315, %s331
      %p333 = scmp.eq.s32.totalorder %s26, 0
      %p334 = por %p332, %p333
      %s336 = sadd.s32 %s335, 1
      %p339 = scmp.eq.s32.totalorder %s20, 1
      %p340 = scmp.ne.s32.totalorder %s335, %s337
      %p341 = scmp.eq.s32.totalorder %s20, 0
      %p342 = por %p340, %p341
      %p343 = scmp.ne.s32.totalorder %s335, %s337
      %p344 = scmp.eq.s32.totalorder %s25, 1
      %p345 = por %p343, %p344
      %p346 = scmp.ne.s32.totalorder %s337, %s338
      %p347 = scmp.eq.s32.totalorder %s25, 0
      %p348 = por %p346, %p347
      %p349 = scmp.ne.s32.totalorder %s337, %s338
      %p350 = scmp.eq.s32.totalorder %s26, 1
      %p351 = por %p349, %p350
      %p353 = scmp.ne.s32.totalorder %s338, %s352
      %p354 = scmp.eq.s32.totalorder %s26, 0
      %p355 = por %p353, %p354
      %p356 = scmp.le.s32.totalorder 1, %s20
      %p357 = scmp.lt.s32.totalorder %s20, 3
      %p358 = pnand %p356, %p357
      %p359 = pneg %p358
      // Predicated region
      $region9: #{text_transformer_forward.1} parent=5 // pred_check
        _
      $region10: #{text_transformer_forward.1} parent=5 // pred_check_branch
        %361 = sbr.rel (%p358) target = $region12
      $region11: #{text_transformer_forward.1} parent=5 // pred_region
        %s362 = ssub.s32 %s20, 1
        // Predicated region
        $region13: #{text_transformer_forward.1} parent=11 // pred_check
          %p363 = pneg %p41
        $region14: #{text_transformer_forward.1} parent=11 // pred_check_branch
          %365 = sbr.rel (%p363) target = $region16
        $region15: #{text_transformer_forward.1} parent=11 // pred_region
          _
        $region16: #{text_transformer_forward.1} parent=11 // pred_fallthru
          _
      $region12: #{text_transformer_forward.1} parent=5 // pred_fallthru
        _
      %p366 = scmp.lt.s32.totalorder %s20, 2
      // Predicated region
      $region17: #{text_transformer_forward.1} parent=5 // pred_check
        %p367 = pneg %p366
      $region18: #{text_transformer_forward.1} parent=5 // pred_check_branch
        %369 = sbr.rel (%p367) target = $region20
      $region19: #{text_transformer_forward.1} parent=5 // pred_region
        // Predicated region
        $region21: #{text_transformer_forward.1} parent=19 // pred_check
          %p370 = pneg %p61
        $region22: #{text_transformer_forward.1} parent=19 // pred_check_branch
          %372 = sbr.rel (%p370) target = $region24
        $region23: #{text_transformer_forward.1} parent=19 // pred_region
          %p373 = scmp.lt.s32.totalorder %s20, 1
          %s374 = scalar_select %p373, %s20, 1
          %s375 = scalar_lea.vmem %s2, %s374
        $region24: #{text_transformer_forward.1} parent=19 // pred_fallthru
          _
        // Predicated region
        $region25: #{text_transformer_forward.1} parent=19 // pred_check
          %p376 = pneg %p87
        $region26: #{text_transformer_forward.1} parent=19 // pred_check_branch
          %378 = sbr.rel (%p376) target = $region28
        $region27: #{text_transformer_forward.1} parent=19 // pred_region
          %p379 = scmp.lt.s32.totalorder %s20, 1
          %s380 = scalar_select %p379, %s20, 1
          %s381 = smul.addr %s380, 8
          %s382 = smul.addr %s381, 4
          %s383 = scalar_lea.vmem %s3, %s382
        $region28: #{text_transformer_forward.1} parent=19 // pred_fallthru
          _
        // Predicated region
        $region29: #{text_transformer_forward.1} parent=19 // pred_check
          %p384 = pneg %p113
        $region30: #{text_transformer_forward.1} parent=19 // pred_check_branch
          %386 = sbr.rel (%p384) target = $region32
        $region31: #{text_transformer_forward.1} parent=19 // pred_region
          %p387 = scmp.lt.s32.totalorder %s20, 1
          %s388 = scalar_select %p387, %s20, 1
          %s389 = smul.addr %s388, 8
          %s390 = smul.addr %s389, 4
          %s391 = scalar_lea.vmem %s4, %s390
        $region32: #{text_transformer_forward.1} parent=19 // pred_fallthru
          _
        // Predicated region
        $region33: #{text_transformer_forward.1} parent=19 // pred_check
          %p392 = pneg %p139
        $region34: #{text_transformer_forward.1} parent=19 // pred_check_branch
          %394 = sbr.rel (%p392) target = $region36
        $region35: #{text_transformer_forward.1} parent=19 // pred_region
          %p395 = scmp.lt.s32.totalorder %s20, 1
          %s396 = scalar_select %p395, %s20, 1
          %s397 = smul.addr %s396, 8
          %s398 = smul.addr %s397, 4
          %s399 = scalar_lea.vmem %s5, %s398
        $region36: #{text_transformer_forward.1} parent=19 // pred_fallthru
          _
        // Predicated region
        $region37: #{text_transformer_forward.1} parent=19 // pred_check
          %p400 = pneg %p165
        $region38: #{text_transformer_forward.1} parent=19 // pred_check_branch
          %402 = sbr.rel (%p400) target = $region40
        $region39: #{text_transformer_forward.1} parent=19 // pred_region
          %p403 = scmp.lt.s32.totalorder %s20, 1
          %s404 = scalar_select %p403, %s20, 1
          %s405 = smul.addr %s404, 8
          %s406 = smul.addr %s405, 4
          %s407 = scalar_lea.vmem %s6, %s406
        $region40: #{text_transformer_forward.1} parent=19 // pred_fallthru
          _
        // Predicated region
        $region41: #{text_transformer_forward.1} parent=19 // pred_check
          %p408 = pneg %p191
        $region42: #{text_transformer_forward.1} parent=19 // pred_check_branch
          %410 = sbr.rel (%p408) target = $region44
        $region43: #{text_transformer_forward.1} parent=19 // pred_region
          %p411 = scmp.lt.s32.totalorder %s20, 1
          %s412 = scalar_select %p411, %s20, 1
          %s413 = scalar_lea.vmem %s7, %s412
        $region44: #{text_transformer_forward.1} parent=19 // pred_fallthru
          _
        // Predicated region
        $region45: #{text_transformer_forward.1} parent=19 // pred_check
          %p414 = pneg %p217
        $region46: #{text_transformer_forward.1} parent=19 // pred_check_branch
          %416 = sbr.rel (%p414) target = $region48
        $region47: #{text_transformer_forward.1} parent=19 // pred_region
          %p417 = scmp.lt.s32.totalorder %s20, 1
          %s418 = scalar_select %p417, %s20, 1
          %s419 = scalar_lea.vmem %s8, %s418
        $region48: #{text_transformer_forward.1} parent=19 // pred_fallthru
          _
        // Predicated region
        $region49: #{text_transformer_forward.1} parent=19 // pred_check
          %p420 = pneg %p243
        $region50: #{text_transformer_forward.1} parent=19 // pred_check_branch
          %422 = sbr.rel (%p420) target = $region52
        $region51: #{text_transformer_forward.1} parent=19 // pred_region
          %p423 = scmp.lt.s32.totalorder %s20, 1
          %s424 = scalar_select %p423, %s20, 1
          %s425 = smul.addr %s424, 16
          %s426 = smul.addr %s425, 4
          %s427 = scalar_lea.vmem %s9, %s426
        $region52: #{text_transformer_forward.1} parent=19 // pred_fallthru
          _
        // Predicated region
        $region53: #{text_transformer_forward.1} parent=19 // pred_check
          %p428 = pneg %p269
        $region54: #{text_transformer_forward.1} parent=19 // pred_check_branch
          %430 = sbr.rel (%p428) target = $region56
        $region55: #{text_transformer_forward.1} parent=19 // pred_region
          %p431 = scmp.lt.s32.totalorder %s20, 1
          %s432 = scalar_select %p431, %s20, 1
          %s433 = smul.addr %s432, 16
          %s434 = smul.addr %s433, 4
          %s435 = scalar_lea.vmem %s10, %s434
        $region56: #{text_transformer_forward.1} parent=19 // pred_fallthru
          _
        // Predicated region
        $region57: #{text_transformer_forward.1} parent=19 // pred_check
          %p436 = pneg %p295
        $region58: #{text_transformer_forward.1} parent=19 // pred_check_branch
          %438 = sbr.rel (%p436) target = $region60
        $region59: #{text_transformer_forward.1} parent=19 // pred_region
          %p439 = scmp.lt.s32.totalorder %s20, 1
          %s440 = scalar_select %p439, %s20, 1
          %s441 = smul.addr %s440, 2
          %s442 = scalar_lea.vmem %s11, %s441
        $region60: #{text_transformer_forward.1} parent=19 // pred_fallthru
          _
        // Predicated region
        $region61: #{text_transformer_forward.1} parent=19 // pred_check
          %p443 = pneg %p321
        $region62: #{text_transformer_forward.1} parent=19 // pred_check_branch
          %445 = sbr.rel (%p443) target = $region64
        $region63: #{text_transformer_forward.1} parent=19 // pred_region
          %p446 = scmp.lt.s32.totalorder %s20, 1
          %s447 = scalar_select %p446, %s20, 1
          %s448 = smul.addr %s447, 32
          %s449 = smul.addr %s448, 4
          %s450 = scalar_lea.vmem %s12, %s449
        $region64: #{text_transformer_forward.1} parent=19 // pred_fallthru
          _
      $region20: #{text_transformer_forward.1} parent=5 // pred_fallthru
        _
      %p451 = scmp.le.s32.totalorder 1, %s20
      %p452 = scmp.lt.s32.totalorder %s20, 3
      %p453 = pnand %p451, %p452
      %p454 = pneg %p453
      // Predicated region
      $region65: #{text_transformer_forward.1} parent=5 // pred_check
        _
      $region66: #{text_transformer_forward.1} parent=5 // pred_check_branch
        %456 = sbr.rel (%p453) target = $region68
      $region67: #{text_transformer_forward.1} parent=5 // pred_region
        %s457 = ssub.s32 %s20, 1
        %p458 = pneg %p41
        %p459 = pneg %p38
        %p460 = scmp.lt.s32.totalorder %s25, 1
        %s461 = scalar_select %p460, %s25, 1
        %s462 = scalar_lea.vmem %s2, %s461
        %p463 = pneg %p67
        %p464 = pneg %p64
        %p465 = scmp.lt.s32.totalorder %s25, 1
        %s466 = scalar_select %p465, %s25, 1
        %s467 = smul.addr %s466, 8
        %s468 = smul.addr %s467, 4
        %s469 = scalar_lea.vmem %s3, %s468
        %p470 = pneg %p93
        %p471 = pneg %p90
        %p472 = scmp.lt.s32.totalorder %s25, 1
        %s473 = scalar_select %p472, %s25, 1
        %s474 = smul.addr %s473, 8
        %s475 = smul.addr %s474, 4
        %s476 = scalar_lea.vmem %s4, %s475
        %p477 = pneg %p119
        %p478 = pneg %p116
        %p479 = scmp.lt.s32.totalorder %s25, 1
        %s480 = scalar_select %p479, %s25, 1
        %s481 = smul.addr %s480, 8
        %s482 = smul.addr %s481, 4
        %s483 = scalar_lea.vmem %s5, %s482
        %p484 = pneg %p145
        %p485 = pneg %p142
        %p486 = scmp.lt.s32.totalorder %s25, 1
        %s487 = scalar_select %p486, %s25, 1
        %s488 = smul.addr %s487, 8
        %s489 = smul.addr %s488, 4
        %s490 = scalar_lea.vmem %s6, %s489
        %p491 = pneg %p171
        %p492 = pneg %p168
        %p493 = scmp.lt.s32.totalorder %s25, 1
        %s494 = scalar_select %p493, %s25, 1
        %s495 = scalar_lea.vmem %s7, %s494
        %p496 = pneg %p197
        %p497 = pneg %p194
        %p498 = scmp.lt.s32.totalorder %s25, 1
        %s499 = scalar_select %p498, %s25, 1
        %s500 = scalar_lea.vmem %s8, %s499
        %p501 = pneg %p223
        %p502 = pneg %p220
        %p503 = scmp.lt.s32.totalorder %s25, 1
        %s504 = scalar_select %p503, %s25, 1
        %s505 = smul.addr %s504, 16
        %s506 = smul.addr %s505, 4
        %s507 = scalar_lea.vmem %s9, %s506
        %p508 = pneg %p249
        %p509 = pneg %p246
        %p510 = scmp.lt.s32.totalorder %s25, 1
        %s511 = scalar_select %p510, %s25, 1
        %s512 = smul.addr %s511, 16
        %s513 = smul.addr %s512, 4
        %s514 = scalar_lea.vmem %s10, %s513
        %p515 = pneg %p275
        %p516 = pneg %p272
        %p517 = scmp.lt.s32.totalorder %s25, 1
        %s518 = scalar_select %p517, %s25, 1
        %s519 = smul.addr %s518, 2
        %s520 = scalar_lea.vmem %s11, %s519
        %p521 = pneg %p301
        %p522 = pneg %p298
        %p523 = scmp.lt.s32.totalorder %s25, 1
        %s524 = scalar_select %p523, %s25, 1
        %s525 = smul.addr %s524, 32
        %s526 = smul.addr %s525, 4
        %s527 = scalar_lea.vmem %s12, %s526
        %p528 = pneg %p327
        %p529 = pneg %p324
        %p530 = pneg %p348
        %p531 = pneg %p345
        %p532 = scmp.lt.s32.totalorder %s25, 1
        %s533 = scalar_select %p532, %s25, 1
        %s534 = scalar_lea.vmem %s2, %s533
        %p535 = scmp.lt.s32.totalorder %s25, 1
        %s536 = scalar_select %p535, %s25, 1
        %s537 = smul.addr %s536, 8
        %s538 = smul.addr %s537, 4
        %s539 = scalar_lea.vmem %s3, %s538
        %p540 = scmp.lt.s32.totalorder %s25, 1
        %s541 = scalar_select %p540, %s25, 1
        %s542 = smul.addr %s541, 8
        %s543 = smul.addr %s542, 4
        %s544 = scalar_lea.vmem %s4, %s543
        %p545 = scmp.lt.s32.totalorder %s25, 1
        %s546 = scalar_select %p545, %s25, 1
        %s547 = smul.addr %s546, 8
        %s548 = smul.addr %s547, 4
        %s549 = scalar_lea.vmem %s5, %s548
        %p550 = scmp.lt.s32.totalorder %s25, 1
        %s551 = scalar_select %p550, %s25, 1
        %s552 = smul.addr %s551, 8
        %s553 = smul.addr %s552, 4
        %s554 = scalar_lea.vmem %s6, %s553
        %p555 = scmp.lt.s32.totalorder %s25, 1
        %s556 = scalar_select %p555, %s25, 1
        %s557 = scalar_lea.vmem %s7, %s556
        %p558 = scmp.lt.s32.totalorder %s25, 1
        %s559 = scalar_select %p558, %s25, 1
        %s560 = scalar_lea.vmem %s8, %s559
        %p561 = scmp.lt.s32.totalorder %s25, 1
        %s562 = scalar_select %p561, %s25, 1
        %s563 = smul.addr %s562, 16
        %s564 = smul.addr %s563, 4
        %s565 = scalar_lea.vmem %s9, %s564
        %p566 = scmp.lt.s32.totalorder %s25, 1
        %s567 = scalar_select %p566, %s25, 1
        %s568 = smul.addr %s567, 16
        %s569 = smul.addr %s568, 4
        %s570 = scalar_lea.vmem %s10, %s569
        %p571 = scmp.lt.s32.totalorder %s25, 1
        %s572 = scalar_select %p571, %s25, 1
        %s573 = smul.addr %s572, 2
        %s574 = scalar_lea.vmem %s11, %s573
        %p575 = scmp.lt.s32.totalorder %s25, 1
        %s576 = scalar_select %p575, %s25, 1
        %s577 = smul.addr %s576, 32
        %s578 = smul.addr %s577, 4
        %s579 = scalar_lea.vmem %s12, %s578
        %p581 = scmp.eq.s32.totalorder %s25, 0
        // Predicated region
        $region69: #{text_transformer_forward.1} parent=67 // pred_check
          %p582 = pneg %p581
        $region70: #{text_transformer_forward.1} parent=67 // pred_check_branch
          %584 = sbr.rel (%p582) target = $region72
        $region71: #{text_transformer_forward.1} parent=67 // pred_region
          $region73: #{text_transformer_forward.1} parent=71
            #allocation5 [shape = 's32[1]{0}', space=sflag, size = 0x4, scoped, tag = 'scoped memory for text_transformer_forward.1']
            %p586 = scmp.lt.u32.totalorder 16, 8
            %p587 = pneg %p586
            // Predicated region
            $region74: #{text_transformer_forward.1} parent=73 // pred_check
              _
            $region75: #{text_transformer_forward.1} parent=73 // pred_check_branch
              %589 = sbr.rel (%p586) target = $region77
            $region76: #{text_transformer_forward.1} parent=73 // pred_region
              %s604 = sand.u32 16, 7
              %p605 = scmp.eq.s32.totalorder %s604, 0
              // Predicated region
              $region89: #{text_transformer_forward.1} parent=76 // pred_check
                %p606 = pneg %p605
              $region90: #{text_transformer_forward.1} parent=76 // pred_check_branch
                %608 = sbr.rel (%p606) target = $region92
              $region91: #{text_transformer_forward.1} parent=76 // pred_region
                loop: start=0, step=1, limit=1
                $region93: #{text_transformer_forward.1} parent=91 // loop_pre_header
                  _
                $region94: #{text_transformer_forward.1} parent=91 // loop_header
                  %s610 = sphi 0, %s614
                  %p611 = scmp.ge.s32.totalorder %s610, 1
                  %s615 = sphi %s0, %s0
                  %s616 = sphi [#allocation3], [#allocation3]
                $region95: #{text_transformer_forward.1} parent=91 // loop_header_branch
                  %613 = sbr.rel (%p611) target = $region99
                $region96: #{text_transformer_forward.1} parent=91 // loop_body
                  %v617 = vld [vmem:[%s615] sm:$0xff]
                  %618 = vst [vmem:[%s616] sm:$0xff] %v617
                  %v619 = vld [vmem:[%s615 + $0x8] sm:$0xff]
                  %620 = vst [vmem:[%s616 + $0x8] sm:$0xff] %v619
                $region97: #{text_transformer_forward.1} parent=91 // loop_footer
                  %s614 = sadd.s32 1, %s610
                $region98: #{text_transformer_forward.1} parent=91 // loop_footer_branch
                  %609 = sbr.rel target = $region94
                $region99: #{text_transformer_forward.1} parent=91 // loop_exit
                  _
              $region92: #{text_transformer_forward.1} parent=76 // pred_fallthru
                _
              %p621 = pneg %p605
              // Predicated region
              $region100: #{text_transformer_forward.1} parent=76 // pred_check
                _
              $region101: #{text_transformer_forward.1} parent=76 // pred_check_branch
                %623 = sbr.rel (%p605) target = $region103
              $region102: #{text_transformer_forward.1} parent=76 // pred_region
                %s624 = sand.u32 16, 7
              $region103: #{text_transformer_forward.1} parent=76 // pred_fallthru
                _
            $region77: #{text_transformer_forward.1} parent=73 // pred_fallthru
              _
            // Predicated region
            $region78: #{text_transformer_forward.1} parent=73 // pred_check
              %p590 = pneg %p586
            $region79: #{text_transformer_forward.1} parent=73 // pred_check_branch
              %592 = sbr.rel (%p590) target = $region81
            $region80: #{text_transformer_forward.1} parent=73 // pred_region
              %s593 = sshllo.u32 0, 16
              loop: start=0, step=1, limit=1
              $region82: #{text_transformer_forward.1} parent=80 // loop_pre_header
                _
              $region83: #{text_transformer_forward.1} parent=80 // loop_header
                %s595 = sphi 0, %s599
                %p596 = scmp.ge.s32.totalorder %s595, 1
                %s600 = sphi %s0, %s0
                %s601 = sphi [#allocation3], [#allocation3]
              $region84: #{text_transformer_forward.1} parent=80 // loop_header_branch
                %598 = sbr.rel (%p596) target = $region88
              $region85: #{text_transformer_forward.1} parent=80 // loop_body
                %v602 = vld [vmem:[%s600] sm:%s593]
                %603 = vst [vmem:[%s601] sm:%s593] %v602
              $region86: #{text_transformer_forward.1} parent=80 // loop_footer
                %s599 = sadd.s32 1, %s595
              $region87: #{text_transformer_forward.1} parent=80 // loop_footer_branch
                %594 = sbr.rel target = $region83
              $region88: #{text_transformer_forward.1} parent=80 // loop_exit
                _
            $region81: #{text_transformer_forward.1} parent=73 // pred_fallthru
              _
            // Predicated region
            $region104: #{text_transformer_forward.1} parent=73 // pred_check
              _
            $region105: #{text_transformer_forward.1} parent=73 // pred_check_branch
              %627 = sbr.rel (0) target = $region107
            $region106: #{text_transformer_forward.1} parent=73 // pred_region
              %628 = vsyncadd [#allocation5], 256
            $region107: #{text_transformer_forward.1} parent=73 // pred_fallthru
              _
            %s629 = smul.u32 16, 1
            %s630 = sshll.u32 %s629, 4
            %631 = dma.done [#allocation5], %s630
        $region72: #{text_transformer_forward.1} parent=67 // pred_fallthru
          _
        %v632 = vld [vmem:[#allocation3] sm:$0xff]
        %v633 = vld [vmem:[#allocation3 + $0x8] sm:$0xff]
        %v634 = vld [vmem:[%s534] sm:$0x1]
        %vm635 = vcmask 523264
        %v636 = vsel %vm635, %v632, 0.0
        %637 = vadd.xlane.f32.xlu0 %v636
        %v638 = vpop.xlane.xlu0 %637
        %v639 = vsel %vm635, %v633, 0.0
        %640 = vadd.xlane.f32.xlu0 %v639
        %v641 = vpop.xlane.xlu0 %640
        %v642 = vmul.f32 %v632, %v632
        %v643 = vmul.f32 %v633, %v633
        %v644 = vsel %vm635, %v642, 0.0
        %645 = vadd.xlane.f32.xlu0 %v644
        %v646 = vpop.xlane.xlu0 %645
        %v647 = vsel %vm635, %v643, 0.0
        %648 = vadd.xlane.f32.xlu0 %v647
        %v649 = vpop.xlane.xlu0 %648
        %v650 = vmul.f32 %v638, 0.015625
        %v651 = vmul.f32 %v641, 0.015625
        %v652 = vmul.f32 %v646, 0.015625
        %v653 = vmul.f32 %v649, 0.015625
        %v654 = vmul.f32 %v650, %v650
        %v655 = vmul.f32 %v651, %v651
        %v656 = vsub.f32 %v652, %v654
        %v657 = vsub.f32 %v653, %v655
        %v658 = vmax.f32 %v656, 0.0
        %v659 = vmax.f32 %v657, 0.0
        %v660 = vsub.f32 %v632, %v650
        %v661 = vsub.f32 %v633, %v651
        %v662 = vadd.f32 %v658, 1e-05
        %v663 = vadd.f32 %v659, 1e-05
        %v664 = vrsqrt.pop %v662
        %v665 = vrsqrt.pop %v663
        %v666 = vmul.f32 %v660, %v664
        %v667 = vmul.f32 %v661, %v665
        %v669 = vlaneseq
        %v670 = vshrl.u32 %v669, 7
        %v671 = vsub.s32 0, %v670
        %v672 = vrot.slane %v634, %v671
        %v674 = vmul.f32 %v666, %v672
        %v675 = vmul.f32 %v667, %v672
        %v676 = vpack.c.bf16 %v675, %v674
        %v677 = vld [vmem:[%s539] sm:$0xf]
        %v678 = vld [vmem:[%s539 + $0x4] sm:$0xf]
        %v679 = vld [vmem:[%s539 + $0x8] sm:$0xf]
        %v680 = vld [vmem:[%s539 + $0xc] sm:$0xf]
        %v681 = vld [vmem:[%s539 + $0x10] sm:$0xf]
        %v682 = vld [vmem:[%s539 + $0x14] sm:$0xf]
        %v683 = vld [vmem:[%s539 + $0x18] sm:$0xf]
        %v684 = vld [vmem:[%s539 + $0x1c] sm:$0xf]
        %v693 = vunpack.c.l.b16 %v677
        %v694 = vunpack.c.l.b16 %v678
        %v695 = vunpack.c.l.b16 %v679
        %v696 = vunpack.c.l.b16 %v680
        %v697 = vunpack.c.l.b16 %v681
        %v698 = vunpack.c.l.b16 %v682
        %v699 = vunpack.c.l.b16 %v683
        %v700 = vunpack.c.l.b16 %v684
        %v701 = vpack.c.b16 %v694, %v693
        %v702 = vpack.c.b16 %v696, %v695
        %v703 = vpack.c.b16 %v698, %v697
        %v704 = vpack.c.b16 %v700, %v699
        %v710 = vsel %vm635, %v676, 0
        %712 = vmatprep.subr.bf16.mxu0 0
        %713 = vmatpush1.bf16.msra.mxu0 %v701
        %714 = vmatprep.subr.bf16.mxu0 0
        %715 = vmatpush1.bf16.msra.mxu0 %v702
        %716 = vmatprep.subr.bf16.mxu0 0
        %717 = vmatpush1.bf16.msra.mxu0 %v703
        %718 = vmatprep.subr.bf16.mxu0 0
        %719 = vmatpush1.bf16.msra.mxu0 %v704
        %720 = vmatprep.subr.bf16.mxu0 0
        %721 = vmatpush1.bf16.msra.mxu0 0
        %722 = vmatprep.subr.bf16.mxu0 0
        %723 = vmatpush1.bf16.msra.mxu0 0
        %724 = vmatprep.subr.bf16.mxu0 0
        %725 = vmatpush1.bf16.msra.mxu0 0
        %726 = vmatprep.subr.bf16.mxu0 0
        %727 = vmatpush1.bf16.msra.mxu0 0
        %728 = vmatprep.subr.bf16.mxu0 0
        %729 = vmatpush1.bf16.msra.mxu0 0
        %730 = vmatprep.subr.bf16.mxu0 0
        %731 = vmatpush1.bf16.msra.mxu0 0
        %732 = vmatprep.subr.bf16.mxu0 0
        %733 = vmatpush1.bf16.msra.mxu0 0
        %734 = vmatprep.subr.bf16.mxu0 0
        %735 = vmatpush1.bf16.msra.mxu0 0
        %736 = vmatprep.subr.bf16.mxu0 0
        %737 = vmatpush1.bf16.msra.mxu0 0
        %738 = vmatprep.subr.bf16.mxu0 0
        %739 = vmatpush1.bf16.msra.mxu0 0
        %740 = vmatprep.subr.bf16.mxu0 0
        %741 = vmatpush1.bf16.msra.mxu0 0
        %742 = vmatprep.subr.bf16.mxu0 0
        %743 = vmatpush1.bf16.msra.mxu0 0
        %744 = vmatprep.mubr.bf16.mxu0 0
        %745 = vmatmul.mubr.bf16.gmra.mrb[0].mxu0 %v710
        %v746 = vpop.f32.mrb[0].mxu0
        %v747 = vadd.f32 0.0, %v746
        %v748 = vpop.f32.mrb[0].mxu0
        %v749 = vpop.f32.mrb[0].mxu0
        %v750 = vadd.f32 0.0, %v749
        %v751 = vpop.f32.mrb[0].mxu0
        %752 = vdwg.mxu0
        %v753 = vld [vmem:[%s544] sm:$0xf]
        %v754 = vld [vmem:[%s544 + $0x4] sm:$0xf]
        %v755 = vld [vmem:[%s544 + $0x8] sm:$0xf]
        %v756 = vld [vmem:[%s544 + $0xc] sm:$0xf]
        %v757 = vld [vmem:[%s544 + $0x10] sm:$0xf]
        %v758 = vld [vmem:[%s544 + $0x14] sm:$0xf]
        %v759 = vld [vmem:[%s544 + $0x18] sm:$0xf]
        %v760 = vld [vmem:[%s544 + $0x1c] sm:$0xf]
        %v769 = vunpack.c.l.b16 %v753
        %v770 = vunpack.c.l.b16 %v754
        %v771 = vunpack.c.l.b16 %v755
        %v772 = vunpack.c.l.b16 %v756
        %v773 = vunpack.c.l.b16 %v757
        %v774 = vunpack.c.l.b16 %v758
        %v775 = vunpack.c.l.b16 %v759
        %v776 = vunpack.c.l.b16 %v760
        %v777 = vpack.c.b16 %v770, %v769
        %v778 = vpack.c.b16 %v772, %v771
        %v779 = vpack.c.b16 %v774, %v773
        %v780 = vpack.c.b16 %v776, %v775
        %785 = vmatprep.subr.bf16.mxu0 0
        %786 = vmatpush1.bf16.msra.mxu0 %v777
        %787 = vmatprep.subr.bf16.mxu0 0
        %788 = vmatpush1.bf16.msra.mxu0 %v778
        %789 = vmatprep.subr.bf16.mxu0 0
        %790 = vmatpush1.bf16.msra.mxu0 %v779
        %791 = vmatprep.subr.bf16.mxu0 0
        %792 = vmatpush1.bf16.msra.mxu0 %v780
        %793 = vmatprep.subr.bf16.mxu0 0
        %794 = vmatpush1.bf16.msra.mxu0 0
        %795 = vmatprep.subr.bf16.mxu0 0
        %796 = vmatpush1.bf16.msra.mxu0 0
        %797 = vmatprep.subr.bf16.mxu0 0
        %798 = vmatpush1.bf16.msra.mxu0 0
        %799 = vmatprep.subr.bf16.mxu0 0
        %800 = vmatpush1.bf16.msra.mxu0 0
        %801 = vmatprep.subr.bf16.mxu0 0
        %802 = vmatpush1.bf16.msra.mxu0 0
        %803 = vmatprep.subr.bf16.mxu0 0
        %804 = vmatpush1.bf16.msra.mxu0 0
        %805 = vmatprep.subr.bf16.mxu0 0
        %806 = vmatpush1.bf16.msra.mxu0 0
        %807 = vmatprep.subr.bf16.mxu0 0
        %808 = vmatpush1.bf16.msra.mxu0 0
        %809 = vmatprep.subr.bf16.mxu0 0
        %810 = vmatpush1.bf16.msra.mxu0 0
        %811 = vmatprep.subr.bf16.mxu0 0
        %812 = vmatpush1.bf16.msra.mxu0 0
        %813 = vmatprep.subr.bf16.mxu0 0
        %814 = vmatpush1.bf16.msra.mxu0 0
        %815 = vmatprep.subr.bf16.mxu0 0
        %816 = vmatpush1.bf16.msra.mxu0 0
        %817 = vmatprep.mubr.bf16.mxu0 0
        %818 = vmatmul.mubr.bf16.gmra.mrb[0].mxu0 %v710
        %v819 = vpop.f32.mrb[0].mxu0
        %v820 = vadd.f32 0.0, %v819
        %v821 = vpop.f32.mrb[0].mxu0
        %v822 = vpop.f32.mrb[0].mxu0
        %v823 = vadd.f32 0.0, %v822
        %v824 = vpop.f32.mrb[0].mxu0
        %825 = vdwg.mxu0
        %v826 = vld [vmem:[%s549] sm:$0xf]
        %v827 = vld [vmem:[%s549 + $0x4] sm:$0xf]
        %v828 = vld [vmem:[%s549 + $0x8] sm:$0xf]
        %v829 = vld [vmem:[%s549 + $0xc] sm:$0xf]
        %v830 = vld [vmem:[%s549 + $0x10] sm:$0xf]
        %v831 = vld [vmem:[%s549 + $0x14] sm:$0xf]
        %v832 = vld [vmem:[%s549 + $0x18] sm:$0xf]
        %v833 = vld [vmem:[%s549 + $0x1c] sm:$0xf]
        %v842 = vunpack.c.l.b16 %v826
        %v843 = vunpack.c.l.b16 %v827
        %v844 = vunpack.c.l.b16 %v828
        %v845 = vunpack.c.l.b16 %v829
        %v846 = vunpack.c.l.b16 %v830
        %v847 = vunpack.c.l.b16 %v831
        %v848 = vunpack.c.l.b16 %v832
        %v849 = vunpack.c.l.b16 %v833
        %v850 = vpack.c.b16 %v843, %v842
        %v851 = vpack.c.b16 %v845, %v844
        %v852 = vpack.c.b16 %v847, %v846
        %v853 = vpack.c.b16 %v849, %v848
        %858 = vmatprep.subr.bf16.mxu0 0
        %859 = vmatpush1.bf16.msra.mxu0 %v850
        %860 = vmatprep.subr.bf16.mxu0 0
        %861 = vmatpush1.bf16.msra.mxu0 %v851
        %862 = vmatprep.subr.bf16.mxu0 0
        %863 = vmatpush1.bf16.msra.mxu0 %v852
        %864 = vmatprep.subr.bf16.mxu0 0
        %865 = vmatpush1.bf16.msra.mxu0 %v853
        %866 = vmatprep.subr.bf16.mxu0 0
        %867 = vmatpush1.bf16.msra.mxu0 0
        %868 = vmatprep.subr.bf16.mxu0 0
        %869 = vmatpush1.bf16.msra.mxu0 0
        %870 = vmatprep.subr.bf16.mxu0 0
        %871 = vmatpush1.bf16.msra.mxu0 0
        %872 = vmatprep.subr.bf16.mxu0 0
        %873 = vmatpush1.bf16.msra.mxu0 0
        %874 = vmatprep.subr.bf16.mxu0 0
        %875 = vmatpush1.bf16.msra.mxu0 0
        %876 = vmatprep.subr.bf16.mxu0 0
        %877 = vmatpush1.bf16.msra.mxu0 0
        %878 = vmatprep.subr.bf16.mxu0 0
        %879 = vmatpush1.bf16.msra.mxu0 0
        %880 = vmatprep.subr.bf16.mxu0 0
        %881 = vmatpush1.bf16.msra.mxu0 0
        %882 = vmatprep.subr.bf16.mxu0 0
        %883 = vmatpush1.bf16.msra.mxu0 0
        %884 = vmatprep.subr.bf16.mxu0 0
        %885 = vmatpush1.bf16.msra.mxu0 0
        %886 = vmatprep.subr.bf16.mxu0 0
        %887 = vmatpush1.bf16.msra.mxu0 0
        %888 = vmatprep.subr.bf16.mxu0 0
        %889 = vmatpush1.bf16.msra.mxu0 0
        %890 = vmatprep.mubr.bf16.mxu0 0
        %891 = vmatmul.mubr.bf16.gmra.mrb[0].mxu0 %v710
        %v892 = vpop.f32.mrb[0].mxu0
        %v893 = vadd.f32 0.0, %v892
        %v894 = vpop.f32.mrb[0].mxu0
        %v895 = vpop.f32.mrb[0].mxu0
        %v896 = vadd.f32 0.0, %v895
        %v897 = vpop.f32.mrb[0].mxu0
        %898 = vdwg.mxu0
        %vm899 = vcmask 261120
        %v901 = vsel %vm899, %v747, 0
        %v904 = vsel %vm899, %v820, 0
        %906 = vmatprep.subr.mxu0 0.0
        %907 = vmatpush1.xpose.msra.mxu0 %v904
        %908 = vmatprep.subr.mxu0 0.0
        %909 = vmatpush1.xpose.msra.mxu0 0.0
        %910 = vmatprep.subr.mxu0 0.0
        %911 = vmatpush1.xpose.msra.mxu0 0.0
        %912 = vmatprep.subr.mxu0 0.0
        %913 = vmatpush1.xpose.msra.mxu0 0.0
        %914 = vmatprep.subr.mxu0 0.0
        %915 = vmatpush1.xpose.msra.mxu0 0.0
        %916 = vmatprep.subr.mxu0 0.0
        %917 = vmatpush1.xpose.msra.mxu0 0.0
        %918 = vmatprep.subr.mxu0 0.0
        %919 = vmatpush1.xpose.msra.mxu0 0.0
        %920 = vmatprep.subr.mxu0 0.0
        %921 = vmatpush1.xpose.msra.mxu0 0.0
        %922 = vmatprep.subr.mxu0 0.0
        %923 = vmatpush1.xpose.msra.mxu0 0.0
        %924 = vmatprep.subr.mxu0 0.0
        %925 = vmatpush1.xpose.msra.mxu0 0.0
        %926 = vmatprep.subr.mxu0 0.0
        %927 = vmatpush1.xpose.msra.mxu0 0.0
        %928 = vmatprep.subr.mxu0 0.0
        %929 = vmatpush1.xpose.msra.mxu0 0.0
        %930 = vmatprep.subr.mxu0 0.0
        %931 = vmatpush1.xpose.msra.mxu0 0.0
        %932 = vmatprep.subr.mxu0 0.0
        %933 = vmatpush1.xpose.msra.mxu0 0.0
        %934 = vmatprep.subr.mxu0 0.0
        %935 = vmatpush1.xpose.msra.mxu0 0.0
        %936 = vmatprep.subr.mxu0 0.0
        %937 = vmatpush1.xpose.msra.mxu0 0.0
        %938 = vmatprep.subr.mxu0 0.0
        %939 = vmatpush1.xpose.msra.mxu0 0.0
        %940 = vmatprep.subr.mxu0 0.0
        %941 = vmatpush1.xpose.msra.mxu0 0.0
        %942 = vmatprep.subr.mxu0 0.0
        %943 = vmatpush1.xpose.msra.mxu0 0.0
        %944 = vmatprep.subr.mxu0 0.0
        %945 = vmatpush1.xpose.msra.mxu0 0.0
        %946 = vmatprep.subr.mxu0 0.0
        %947 = vmatpush1.xpose.msra.mxu0 0.0
        %948 = vmatprep.subr.mxu0 0.0
        %949 = vmatpush1.xpose.msra.mxu0 0.0
        %950 = vmatprep.subr.mxu0 0.0
        %951 = vmatpush1.xpose.msra.mxu0 0.0
        %952 = vmatprep.subr.mxu0 0.0
        %953 = vmatpush1.xpose.msra.mxu0 0.0
        %954 = vmatprep.subr.mxu0 0.0
        %955 = vmatpush1.xpose.msra.mxu0 0.0
        %956 = vmatprep.subr.mxu0 0.0
        %957 = vmatpush1.xpose.msra.mxu0 0.0
        %958 = vmatprep.subr.mxu0 0.0
        %959 = vmatpush1.xpose.msra.mxu0 0.0
        %960 = vmatprep.subr.mxu0 0.0
        %961 = vmatpush1.xpose.msra.mxu0 0.0
        %962 = vmatprep.subr.mxu0 0.0
        %963 = vmatpush1.xpose.msra.mxu0 0.0
        %964 = vmatprep.subr.mxu0 0.0
        %965 = vmatpush1.xpose.msra.mxu0 0.0
        %966 = vmatprep.subr.mxu0 0.0
        %967 = vmatpush1.xpose.msra.mxu0 0.0
        %968 = vmatprep.subr.mxu0 0.0
        %969 = vmatpush1.xpose.msra.mxu0 0.0
        %970 = vmatprep.mubr.f32.mxu0 0.0
        %971 = vmatmul.mubr.f32.gmra.mrb[0].mxu0 %v901
        %v972 = vpop.f32.mrb[0].mxu0
        %v973 = vadd.f32 0.0, %v972
        %v974 = vpop.f32.mrb[0].mxu0
        %975 = vdwg.mxu0
        %v977 = vsel %vm899, %v750, 0
        %v980 = vsel %vm899, %v823, 0
        %982 = vmatprep.subr.mxu0 0.0
        %983 = vmatpush1.xpose.msra.mxu0 %v980
        %984 = vmatprep.subr.mxu0 0.0
        %985 = vmatpush1.xpose.msra.mxu0 0.0
        %986 = vmatprep.subr.mxu0 0.0
        %987 = vmatpush1.xpose.msra.mxu0 0.0
        %988 = vmatprep.subr.mxu0 0.0
        %989 = vmatpush1.xpose.msra.mxu0 0.0
        %990 = vmatprep.subr.mxu0 0.0
        %991 = vmatpush1.xpose.msra.mxu0 0.0
        %992 = vmatprep.subr.mxu0 0.0
        %993 = vmatpush1.xpose.msra.mxu0 0.0
        %994 = vmatprep.subr.mxu0 0.0
        %995 = vmatpush1.xpose.msra.mxu0 0.0
        %996 = vmatprep.subr.mxu0 0.0
        %997 = vmatpush1.xpose.msra.mxu0 0.0
        %998 = vmatprep.subr.mxu0 0.0
        %999 = vmatpush1.xpose.msra.mxu0 0.0
        %1000 = vmatprep.subr.mxu0 0.0
        %1001 = vmatpush1.xpose.msra.mxu0 0.0
        %1002 = vmatprep.subr.mxu0 0.0
        %1003 = vmatpush1.xpose.msra.mxu0 0.0
        %1004 = vmatprep.subr.mxu0 0.0
        %1005 = vmatpush1.xpose.msra.mxu0 0.0
        %1006 = vmatprep.subr.mxu0 0.0
        %1007 = vmatpush1.xpose.msra.mxu0 0.0
        %1008 = vmatprep.subr.mxu0 0.0
        %1009 = vmatpush1.xpose.msra.mxu0 0.0
        %1010 = vmatprep.subr.mxu0 0.0
        %1011 = vmatpush1.xpose.msra.mxu0 0.0
        %1012 = vmatprep.subr.mxu0 0.0
        %1013 = vmatpush1.xpose.msra.mxu0 0.0
        %1014 = vmatprep.subr.mxu0 0.0
        %1015 = vmatpush1.xpose.msra.mxu0 0.0
        %1016 = vmatprep.subr.mxu0 0.0
        %1017 = vmatpush1.xpose.msra.mxu0 0.0
        %1018 = vmatprep.subr.mxu0 0.0
        %1019 = vmatpush1.xpose.msra.mxu0 0.0
        %1020 = vmatprep.subr.mxu0 0.0
        %1021 = vmatpush1.xpose.msra.mxu0 0.0
        %1022 = vmatprep.subr.mxu0 0.0
        %1023 = vmatpush1.xpose.msra.mxu0 0.0
        %1024 = vmatprep.subr.mxu0 0.0
        %1025 = vmatpush1.xpose.msra.mxu0 0.0
        %1026 = vmatprep.subr.mxu0 0.0
        %1027 = vmatpush1.xpose.msra.mxu0 0.0
        %1028 = vmatprep.subr.mxu0 0.0
        %1029 = vmatpush1.xpose.msra.mxu0 0.0
        %1030 = vmatprep.subr.mxu0 0.0
        %1031 = vmatpush1.xpose.msra.mxu0 0.0
        %1032 = vmatprep.subr.mxu0 0.0
        %1033 = vmatpush1.xpose.msra.mxu0 0.0
        %1034 = vmatprep.subr.mxu0 0.0
        %1035 = vmatpush1.xpose.msra.mxu0 0.0
        %1036 = vmatprep.subr.mxu0 0.0
        %1037 = vmatpush1.xpose.msra.mxu0 0.0
        %1038 = vmatprep.subr.mxu0 0.0
        %1039 = vmatpush1.xpose.msra.mxu0 0.0
        %1040 = vmatprep.subr.mxu0 0.0
        %1041 = vmatpush1.xpose.msra.mxu0 0.0
        %1042 = vmatprep.subr.mxu0 0.0
        %1043 = vmatpush1.xpose.msra.mxu0 0.0
        %1044 = vmatprep.subr.mxu0 0.0
        %1045 = vmatpush1.xpose.msra.mxu0 0.0
        %1046 = vmatprep.mubr.f32.mxu0 0.0
        %1047 = vmatmul.mubr.f32.gmra.mrb[0].mxu0 %v977
        %v1048 = vpop.f32.mrb[0].mxu0
        %v1049 = vadd.f32 0.0, %v1048
        %v1050 = vpop.f32.mrb[0].mxu0
        %1051 = vdwg.mxu0
        %vm1052 = vcmask 64512
        %v1053 = vsel %vm1052, %v973, -inf
        %1054 = vmax.xlane.f32.xlu0 %v1053
        %v1055 = vpop.xlane.xlu0 %1054
        %v1056 = vsel %vm1052, %v1049, -inf
        %1057 = vmax.xlane.f32.xlu0 %v1056
        %v1058 = vpop.xlane.xlu0 %1057
        %v1059 = vsub.f32 %v973, %v1055
        %v1060 = vsub.f32 %v1049, %v1058
        %v1061 = vmul.f32 %v1059, 1.442695
        %v1062 = vpow.pop %v1061
        %v1063 = vmul.f32 %v1060, 1.442695
        %v1064 = vpow.pop %v1063
        %v1065 = vsel %vm1052, %v1062, 0.0
        %1066 = vadd.xlane.f32.xlu0 %v1065
        %v1067 = vpop.xlane.xlu0 %1066
        %v1068 = vsel %vm1052, %v1064, 0.0
        %1069 = vadd.xlane.f32.xlu0 %v1068
        %v1070 = vpop.xlane.xlu0 %1069
        %v1071 = vrcp.pop %v1067
        %v1072 = vrcp.pop %v1070
        %v1073 = vmul.f32 %v1062, %v1071
        %v1074 = vmul.f32 %v1064, %v1072
        %v1076 = vsel %vm1052, %v1073, 0
        %1078 = vmatprep.subr.mxu0 0.0
        %1079 = vmatpush1.msra.mxu0 %v893
        %1080 = vmatprep.subr.mxu0 0.0
        %1081 = vmatpush1.msra.mxu0 0.0
        %1082 = vmatprep.subr.mxu0 0.0
        %1083 = vmatpush1.msra.mxu0 0.0
        %1084 = vmatprep.subr.mxu0 0.0
        %1085 = vmatpush1.msra.mxu0 0.0
        %1086 = vmatprep.subr.mxu0 0.0
        %1087 = vmatpush1.msra.mxu0 0.0
        %1088 = vmatprep.subr.mxu0 0.0
        %1089 = vmatpush1.msra.mxu0 0.0
        %1090 = vmatprep.subr.mxu0 0.0
        %1091 = vmatpush1.msra.mxu0 0.0
        %1092 = vmatprep.subr.mxu0 0.0
        %1093 = vmatpush1.msra.mxu0 0.0
        %1094 = vmatprep.subr.mxu0 0.0
        %1095 = vmatpush1.msra.mxu0 0.0
        %1096 = vmatprep.subr.mxu0 0.0
        %1097 = vmatpush1.msra.mxu0 0.0
        %1098 = vmatprep.subr.mxu0 0.0
        %1099 = vmatpush1.msra.mxu0 0.0
        %1100 = vmatprep.subr.mxu0 0.0
        %1101 = vmatpush1.msra.mxu0 0.0
        %1102 = vmatprep.subr.mxu0 0.0
        %1103 = vmatpush1.msra.mxu0 0.0
        %1104 = vmatprep.subr.mxu0 0.0
        %1105 = vmatpush1.msra.mxu0 0.0
        %1106 = vmatprep.subr.mxu0 0.0
        %1107 = vmatpush1.msra.mxu0 0.0
        %1108 = vmatprep.subr.mxu0 0.0
        %1109 = vmatpush1.msra.mxu0 0.0
        %1110 = vmatprep.subr.mxu0 0.0
        %1111 = vmatpush1.msra.mxu0 0.0
        %1112 = vmatprep.subr.mxu0 0.0
        %1113 = vmatpush1.msra.mxu0 0.0
        %1114 = vmatprep.subr.mxu0 0.0
        %1115 = vmatpush1.msra.mxu0 0.0
        %1116 = vmatprep.subr.mxu0 0.0
        %1117 = vmatpush1.msra.mxu0 0.0
        %1118 = vmatprep.subr.mxu0 0.0
        %1119 = vmatpush1.msra.mxu0 0.0
        %1120 = vmatprep.subr.mxu0 0.0
        %1121 = vmatpush1.msra.mxu0 0.0
        %1122 = vmatprep.subr.mxu0 0.0
        %1123 = vmatpush1.msra.mxu0 0.0
        %1124 = vmatprep.subr.mxu0 0.0
        %1125 = vmatpush1.msra.mxu0 0.0
        %1126 = vmatprep.subr.mxu0 0.0
        %1127 = vmatpush1.msra.mxu0 0.0
        %1128 = vmatprep.subr.mxu0 0.0
        %1129 = vmatpush1.msra.mxu0 0.0
        %1130 = vmatprep.subr.mxu0 0.0
        %1131 = vmatpush1.msra.mxu0 0.0
        %1132 = vmatprep.subr.mxu0 0.0
        %1133 = vmatpush1.msra.mxu0 0.0
        %1134 = vmatprep.subr.mxu0 0.0
        %1135 = vmatpush1.msra.mxu0 0.0
        %1136 = vmatprep.subr.mxu0 0.0
        %1137 = vmatpush1.msra.mxu0 0.0
        %1138 = vmatprep.subr.mxu0 0.0
        %1139 = vmatpush1.msra.mxu0 0.0
        %1140 = vmatprep.subr.mxu0 0.0
        %1141 = vmatpush1.msra.mxu0 0.0
        %1142 = vmatprep.mubr.f32.mxu0 0.0
        %1143 = vmatmul.mubr.f32.gmra.mrb[0].mxu0 %v1076
        %v1144 = vpop.f32.mrb[0].mxu0
        %v1145 = vadd.f32 0.0, %v1144
        %v1146 = vpop.f32.mrb[0].mxu0
        %1147 = vdwg.mxu0
        %v1149 = vsel %vm1052, %v1074, 0
        %1151 = vmatprep.subr.mxu0 0.0
        %1152 = vmatpush1.msra.mxu0 %v896
        %1153 = vmatprep.subr.mxu0 0.0
        %1154 = vmatpush1.msra.mxu0 0.0
        %1155 = vmatprep.subr.mxu0 0.0
        %1156 = vmatpush1.msra.mxu0 0.0
        %1157 = vmatprep.subr.mxu0 0.0
        %1158 = vmatpush1.msra.mxu0 0.0
        %1159 = vmatprep.subr.mxu0 0.0
        %1160 = vmatpush1.msra.mxu0 0.0
        %1161 = vmatprep.subr.mxu0 0.0
        %1162 = vmatpush1.msra.mxu0 0.0
        %1163 = vmatprep.subr.mxu0 0.0
        %1164 = vmatpush1.msra.mxu0 0.0
        %1165 = vmatprep.subr.mxu0 0.0
        %1166 = vmatpush1.msra.mxu0 0.0
        %1167 = vmatprep.subr.mxu0 0.0
        %1168 = vmatpush1.msra.mxu0 0.0
        %1169 = vmatprep.subr.mxu0 0.0
        %1170 = vmatpush1.msra.mxu0 0.0
        %1171 = vmatprep.subr.mxu0 0.0
        %1172 = vmatpush1.msra.mxu0 0.0
        %1173 = vmatprep.subr.mxu0 0.0
        %1174 = vmatpush1.msra.mxu0 0.0
        %1175 = vmatprep.subr.mxu0 0.0
        %1176 = vmatpush1.msra.mxu0 0.0
        %1177 = vmatprep.subr.mxu0 0.0
        %1178 = vmatpush1.msra.mxu0 0.0
        %1179 = vmatprep.subr.mxu0 0.0
        %1180 = vmatpush1.msra.mxu0 0.0
        %1181 = vmatprep.subr.mxu0 0.0
        %1182 = vmatpush1.msra.mxu0 0.0
        %1183 = vmatprep.subr.mxu0 0.0
        %1184 = vmatpush1.msra.mxu0 0.0
        %1185 = vmatprep.subr.mxu0 0.0
        %1186 = vmatpush1.msra.mxu0 0.0
        %1187 = vmatprep.subr.mxu0 0.0
        %1188 = vmatpush1.msra.mxu0 0.0
        %1189 = vmatprep.subr.mxu0 0.0
        %1190 = vmatpush1.msra.mxu0 0.0
        %1191 = vmatprep.subr.mxu0 0.0
        %1192 = vmatpush1.msra.mxu0 0.0
        %1193 = vmatprep.subr.mxu0 0.0
        %1194 = vmatpush1.msra.mxu0 0.0
        %1195 = vmatprep.subr.mxu0 0.0
        %1196 = vmatpush1.msra.mxu0 0.0
        %1197 = vmatprep.subr.mxu0 0.0
        %1198 = vmatpush1.msra.mxu0 0.0
        %1199 = vmatprep.subr.mxu0 0.0
        %1200 = vmatpush1.msra.mxu0 0.0
        %1201 = vmatprep.subr.mxu0 0.0
        %1202 = vmatpush1.msra.mxu0 0.0
        %1203 = vmatprep.subr.mxu0 0.0
        %1204 = vmatpush1.msra.mxu0 0.0
        %1205 = vmatprep.subr.mxu0 0.0
        %1206 = vmatpush1.msra.mxu0 0.0
        %1207 = vmatprep.subr.mxu0 0.0
        %1208 = vmatpush1.msra.mxu0 0.0
        %1209 = vmatprep.subr.mxu0 0.0
        %1210 = vmatpush1.msra.mxu0 0.0
        %1211 = vmatprep.subr.mxu0 0.0
        %1212 = vmatpush1.msra.mxu0 0.0
        %1213 = vmatprep.subr.mxu0 0.0
        %1214 = vmatpush1.msra.mxu0 0.0
        %1215 = vmatprep.mubr.f32.mxu0 0.0
        %1216 = vmatmul.mubr.f32.gmra.mrb[0].mxu0 %v1149
        %v1217 = vpop.f32.mrb[0].mxu0
        %v1218 = vadd.f32 0.0, %v1217
        %v1219 = vpop.f32.mrb[0].mxu0
        %1220 = vdwg.mxu0
        %1221 = vst.msk [vmem:[#allocation2] sm:$0xff] %vm899, %v1145
        %1222 = vst.msk [vmem:[#allocation2 + $0x8] sm:$0xff] %vm899, %v1218
        %1223 = vrot.lane.b32.xlu0 %v747, 96
        %v1224 = vpop.permute.xlu0 %1223
        %1225 = vrot.lane.b32.xlu0 %v820, 96
        %v1226 = vpop.permute.xlu0 %1225
        %v1227 = vsel %vm899, %v1224, 0
        %v1229 = vsel %vm899, %v1226, 0
        %1231 = vmatprep.subr.mxu0 0.0
        %1232 = vmatpush1.xpose.msra.mxu0 %v1229
        %1233 = vmatprep.subr.mxu0 0.0
        %1234 = vmatpush1.xpose.msra.mxu0 0.0
        %1235 = vmatprep.subr.mxu0 0.0
        %1236 = vmatpush1.xpose.msra.mxu0 0.0
        %1237 = vmatprep.subr.mxu0 0.0
        %1238 = vmatpush1.xpose.msra.mxu0 0.0
        %1239 = vmatprep.subr.mxu0 0.0
        %1240 = vmatpush1.xpose.msra.mxu0 0.0
        %1241 = vmatprep.subr.mxu0 0.0
        %1242 = vmatpush1.xpose.msra.mxu0 0.0
        %1243 = vmatprep.subr.mxu0 0.0
        %1244 = vmatpush1.xpose.msra.mxu0 0.0
        %1245 = vmatprep.subr.mxu0 0.0
        %1246 = vmatpush1.xpose.msra.mxu0 0.0
        %1247 = vmatprep.subr.mxu0 0.0
        %1248 = vmatpush1.xpose.msra.mxu0 0.0
        %1249 = vmatprep.subr.mxu0 0.0
        %1250 = vmatpush1.xpose.msra.mxu0 0.0
        %1251 = vmatprep.subr.mxu0 0.0
        %1252 = vmatpush1.xpose.msra.mxu0 0.0
        %1253 = vmatprep.subr.mxu0 0.0
        %1254 = vmatpush1.xpose.msra.mxu0 0.0
        %1255 = vmatprep.subr.mxu0 0.0
        %1256 = vmatpush1.xpose.msra.mxu0 0.0
        %1257 = vmatprep.subr.mxu0 0.0
        %1258 = vmatpush1.xpose.msra.mxu0 0.0
        %1259 = vmatprep.subr.mxu0 0.0
        %1260 = vmatpush1.xpose.msra.mxu0 0.0
        %1261 = vmatprep.subr.mxu0 0.0
        %1262 = vmatpush1.xpose.msra.mxu0 0.0
        %1263 = vmatprep.subr.mxu0 0.0
        %1264 = vmatpush1.xpose.msra.mxu0 0.0
        %1265 = vmatprep.subr.mxu0 0.0
        %1266 = vmatpush1.xpose.msra.mxu0 0.0
        %1267 = vmatprep.subr.mxu0 0.0
        %1268 = vmatpush1.xpose.msra.mxu0 0.0
        %1269 = vmatprep.subr.mxu0 0.0
        %1270 = vmatpush1.xpose.msra.mxu0 0.0
        %1271 = vmatprep.subr.mxu0 0.0
        %1272 = vmatpush1.xpose.msra.mxu0 0.0
        %1273 = vmatprep.subr.mxu0 0.0
        %1274 = vmatpush1.xpose.msra.mxu0 0.0
        %1275 = vmatprep.subr.mxu0 0.0
        %1276 = vmatpush1.xpose.msra.mxu0 0.0
        %1277 = vmatprep.subr.mxu0 0.0
        %1278 = vmatpush1.xpose.msra.mxu0 0.0
        %1279 = vmatprep.subr.mxu0 0.0
        %1280 = vmatpush1.xpose.msra.mxu0 0.0
        %1281 = vmatprep.subr.mxu0 0.0
        %1282 = vmatpush1.xpose.msra.mxu0 0.0
        %1283 = vmatprep.subr.mxu0 0.0
        %1284 = vmatpush1.xpose.msra.mxu0 0.0
        %1285 = vmatprep.subr.mxu0 0.0
        %1286 = vmatpush1.xpose.msra.mxu0 0.0
        %1287 = vmatprep.subr.mxu0 0.0
        %1288 = vmatpush1.xpose.msra.mxu0 0.0
        %1289 = vmatprep.subr.mxu0 0.0
        %1290 = vmatpush1.xpose.msra.mxu0 0.0
        %1291 = vmatprep.subr.mxu0 0.0
        %1292 = vmatpush1.xpose.msra.mxu0 0.0
        %1293 = vmatprep.subr.mxu0 0.0
        %1294 = vmatpush1.xpose.msra.mxu0 0.0
        %1295 = vmatprep.mubr.f32.mxu0 0.0
        %1296 = vmatmul.mubr.f32.gmra.mrb[0].mxu0 %v1227
        %v1297 = vpop.f32.mrb[0].mxu0
        %v1298 = vadd.f32 0.0, %v1297
        %v1299 = vpop.f32.mrb[0].mxu0
        %1300 = vdwg.mxu0
        %1301 = vrot.lane.b32.xlu0 %v750, 96
        %v1302 = vpop.permute.xlu0 %1301
        %1303 = vrot.lane.b32.xlu0 %v823, 96
        %v1304 = vpop.permute.xlu0 %1303
        %v1305 = vsel %vm899, %v1302, 0
        %v1307 = vsel %vm899, %v1304, 0
        %1309 = vmatprep.subr.mxu0 0.0
        %1310 = vmatpush1.xpose.msra.mxu0 %v1307
        %1311 = vmatprep.subr.mxu0 0.0
        %1312 = vmatpush1.xpose.msra.mxu0 0.0
        %1313 = vmatprep.subr.mxu0 0.0
        %1314 = vmatpush1.xpose.msra.mxu0 0.0
        %1315 = vmatprep.subr.mxu0 0.0
        %1316 = vmatpush1.xpose.msra.mxu0 0.0
        %1317 = vmatprep.subr.mxu0 0.0
        %1318 = vmatpush1.xpose.msra.mxu0 0.0
        %1319 = vmatprep.subr.mxu0 0.0
        %1320 = vmatpush1.xpose.msra.mxu0 0.0
        %1321 = vmatprep.subr.mxu0 0.0
        %1322 = vmatpush1.xpose.msra.mxu0 0.0
        %1323 = vmatprep.subr.mxu0 0.0
        %1324 = vmatpush1.xpose.msra.mxu0 0.0
        %1325 = vmatprep.subr.mxu0 0.0
        %1326 = vmatpush1.xpose.msra.mxu0 0.0
        %1327 = vmatprep.subr.mxu0 0.0
        %1328 = vmatpush1.xpose.msra.mxu0 0.0
        %1329 = vmatprep.subr.mxu0 0.0
        %1330 = vmatpush1.xpose.msra.mxu0 0.0
        %1331 = vmatprep.subr.mxu0 0.0
        %1332 = vmatpush1.xpose.msra.mxu0 0.0
        %1333 = vmatprep.subr.mxu0 0.0
        %1334 = vmatpush1.xpose.msra.mxu0 0.0
        %1335 = vmatprep.subr.mxu0 0.0
        %1336 = vmatpush1.xpose.msra.mxu0 0.0
        %1337 = vmatprep.subr.mxu0 0.0
        %1338 = vmatpush1.xpose.msra.mxu0 0.0
        %1339 = vmatprep.subr.mxu0 0.0
        %1340 = vmatpush1.xpose.msra.mxu0 0.0
        %1341 = vmatprep.subr.mxu0 0.0
        %1342 = vmatpush1.xpose.msra.mxu0 0.0
        %1343 = vmatprep.subr.mxu0 0.0
        %1344 = vmatpush1.xpose.msra.mxu0 0.0
        %1345 = vmatprep.subr.mxu0 0.0
        %1346 = vmatpush1.xpose.msra.mxu0 0.0
        %1347 = vmatprep.subr.mxu0 0.0
        %1348 = vmatpush1.xpose.msra.mxu0 0.0
        %1349 = vmatprep.subr.mxu0 0.0
        %1350 = vmatpush1.xpose.msra.mxu0 0.0
        %1351 = vmatprep.subr.mxu0 0.0
        %1352 = vmatpush1.xpose.msra.mxu0 0.0
        %1353 = vmatprep.subr.mxu0 0.0
        %1354 = vmatpush1.xpose.msra.mxu0 0.0
        %1355 = vmatprep.subr.mxu0 0.0
        %1356 = vmatpush1.xpose.msra.mxu0 0.0
        %1357 = vmatprep.subr.mxu0 0.0
        %1358 = vmatpush1.xpose.msra.mxu0 0.0
        %1359 = vmatprep.subr.mxu0 0.0
        %1360 = vmatpush1.xpose.msra.mxu0 0.0
        %1361 = vmatprep.subr.mxu0 0.0
        %1362 = vmatpush1.xpose.msra.mxu0 0.0
        %1363 = vmatprep.subr.mxu0 0.0
        %1364 = vmatpush1.xpose.msra.mxu0 0.0
        %1365 = vmatprep.subr.mxu0 0.0
        %1366 = vmatpush1.xpose.msra.mxu0 0.0
        %1367 = vmatprep.subr.mxu0 0.0
        %1368 = vmatpush1.xpose.msra.mxu0 0.0
        %1369 = vmatprep.subr.mxu0 0.0
        %1370 = vmatpush1.xpose.msra.mxu0 0.0
        %1371 = vmatprep.subr.mxu0 0.0
        %1372 = vmatpush1.xpose.msra.mxu0 0.0
        %1373 = vmatprep.mubr.f32.mxu0 0.0
        %1374 = vmatmul.mubr.f32.gmra.mrb[0].mxu0 %v1305
        %v1375 = vpop.f32.mrb[0].mxu0
        %v1376 = vadd.f32 0.0, %v1375
        %v1377 = vpop.f32.mrb[0].mxu0
        %1378 = vdwg.mxu0
        %v1379 = vsel %vm1052, %v1298, -inf
        %1380 = vmax.xlane.f32.xlu0 %v1379
        %v1381 = vpop.xlane.xlu0 %1380
        %v1382 = vsel %vm1052, %v1376, -inf
        %1383 = vmax.xlane.f32.xlu0 %v1382
        %v1384 = vpop.xlane.xlu0 %1383
        %v1385 = vsub.f32 %v1298, %v1381
        %v1386 = vsub.f32 %v1376, %v1384
        %v1387 = vmul.f32 %v1385, 1.442695
        %v1388 = vpow.pop %v1387
        %v1389 = vmul.f32 %v1386, 1.442695
        %v1390 = vpow.pop %v1389
        %v1391 = vsel %vm1052, %v1388, 0.0
        %1392 = vadd.xlane.f32.xlu0 %v1391
        %v1393 = vpop.xlane.xlu0 %1392
        %v1394 = vsel %vm1052, %v1390, 0.0
        %1395 = vadd.xlane.f32.xlu0 %v1394
        %v1396 = vpop.xlane.xlu0 %1395
        %v1397 = vrcp.pop %v1393
        %v1398 = vrcp.pop %v1396
        %v1399 = vmul.f32 %v1388, %v1397
        %v1400 = vmul.f32 %v1390, %v1398
        %1402 = vrot.lane.b32.xlu0 %v893, 96
        %v1403 = vpop.permute.xlu0 %1402
        %v1406 = vsel %vm1052, %v1399, 0
        %1408 = vmatprep.subr.mxu0 0.0
        %1409 = vmatpush1.msra.mxu0 %v1403
        %1410 = vmatprep.subr.mxu0 0.0
        %1411 = vmatpush1.msra.mxu0 0.0
        %1412 = vmatprep.subr.mxu0 0.0
        %1413 = vmatpush1.msra.mxu0 0.0
        %1414 = vmatprep.subr.mxu0 0.0
        %1415 = vmatpush1.msra.mxu0 0.0
        %1416 = vmatprep.subr.mxu0 0.0
        %1417 = vmatpush1.msra.mxu0 0.0
        %1418 = vmatprep.subr.mxu0 0.0
        %1419 = vmatpush1.msra.mxu0 0.0
        %1420 = vmatprep.subr.mxu0 0.0
        %1421 = vmatpush1.msra.mxu0 0.0
        %1422 = vmatprep.subr.mxu0 0.0
        %1423 = vmatpush1.msra.mxu0 0.0
        %1424 = vmatprep.subr.mxu0 0.0
        %1425 = vmatpush1.msra.mxu0 0.0
        %1426 = vmatprep.subr.mxu0 0.0
        %1427 = vmatpush1.msra.mxu0 0.0
        %1428 = vmatprep.subr.mxu0 0.0
        %1429 = vmatpush1.msra.mxu0 0.0
        %1430 = vmatprep.subr.mxu0 0.0
        %1431 = vmatpush1.msra.mxu0 0.0
        %1432 = vmatprep.subr.mxu0 0.0
        %1433 = vmatpush1.msra.mxu0 0.0
        %1434 = vmatprep.subr.mxu0 0.0
        %1435 = vmatpush1.msra.mxu0 0.0
        %1436 = vmatprep.subr.mxu0 0.0
        %1437 = vmatpush1.msra.mxu0 0.0
        %1438 = vmatprep.subr.mxu0 0.0
        %1439 = vmatpush1.msra.mxu0 0.0
        %1440 = vmatprep.subr.mxu0 0.0
        %1441 = vmatpush1.msra.mxu0 0.0
        %1442 = vmatprep.subr.mxu0 0.0
        %1443 = vmatpush1.msra.mxu0 0.0
        %1444 = vmatprep.subr.mxu0 0.0
        %1445 = vmatpush1.msra.mxu0 0.0
        %1446 = vmatprep.subr.mxu0 0.0
        %1447 = vmatpush1.msra.mxu0 0.0
        %1448 = vmatprep.subr.mxu0 0.0
        %1449 = vmatpush1.msra.mxu0 0.0
        %1450 = vmatprep.subr.mxu0 0.0
        %1451 = vmatpush1.msra.mxu0 0.0
        %1452 = vmatprep.subr.mxu0 0.0
        %1453 = vmatpush1.msra.mxu0 0.0
        %1454 = vmatprep.subr.mxu0 0.0
        %1455 = vmatpush1.msra.mxu0 0.0
        %1456 = vmatprep.subr.mxu0 0.0
        %1457 = vmatpush1.msra.mxu0 0.0
        %1458 = vmatprep.subr.mxu0 0.0
        %1459 = vmatpush1.msra.mxu0 0.0
        %1460 = vmatprep.subr.mxu0 0.0
        %1461 = vmatpush1.msra.mxu0 0.0
        %1462 = vmatprep.subr.mxu0 0.0
        %1463 = vmatpush1.msra.mxu0 0.0
        %1464 = vmatprep.subr.mxu0 0.0
        %1465 = vmatpush1.msra.mxu0 0.0
        %1466 = vmatprep.subr.mxu0 0.0
        %1467 = vmatpush1.msra.mxu0 0.0
        %1468 = vmatprep.subr.mxu0 0.0
        %1469 = vmatpush1.msra.mxu0 0.0
        %1470 = vmatprep.subr.mxu0 0.0
        %1471 = vmatpush1.msra.mxu0 0.0
        %1472 = vmatprep.mubr.f32.mxu0 0.0
        %1473 = vmatmul.mubr.f32.gmra.mrb[0].mxu0 %v1406
        %v1474 = vpop.f32.mrb[0].mxu0
        %v1475 = vadd.f32 0.0, %v1474
        %v1476 = vpop.f32.mrb[0].mxu0
        %1477 = vdwg.mxu0
        %1479 = vrot.lane.b32.xlu0 %v896, 96
        %v1480 = vpop.permute.xlu0 %1479
        %v1483 = vsel %vm1052, %v1400, 0
        %1485 = vmatprep.subr.mxu0 0.0
        %1486 = vmatpush1.msra.mxu0 %v1480
        %1487 = vmatprep.subr.mxu0 0.0
        %1488 = vmatpush1.msra.mxu0 0.0
        %1489 = vmatprep.subr.mxu0 0.0
        %1490 = vmatpush1.msra.mxu0 0.0
        %1491 = vmatprep.subr.mxu0 0.0
        %1492 = vmatpush1.msra.mxu0 0.0
        %1493 = vmatprep.subr.mxu0 0.0
        %1494 = vmatpush1.msra.mxu0 0.0
        %1495 = vmatprep.subr.mxu0 0.0
        %1496 = vmatpush1.msra.mxu0 0.0
        %1497 = vmatprep.subr.mxu0 0.0
        %1498 = vmatpush1.msra.mxu0 0.0
        %1499 = vmatprep.subr.mxu0 0.0
        %1500 = vmatpush1.msra.mxu0 0.0
        %1501 = vmatprep.subr.mxu0 0.0
        %1502 = vmatpush1.msra.mxu0 0.0
        %1503 = vmatprep.subr.mxu0 0.0
        %1504 = vmatpush1.msra.mxu0 0.0
        %1505 = vmatprep.subr.mxu0 0.0
        %1506 = vmatpush1.msra.mxu0 0.0
        %1507 = vmatprep.subr.mxu0 0.0
        %1508 = vmatpush1.msra.mxu0 0.0
        %1509 = vmatprep.subr.mxu0 0.0
        %1510 = vmatpush1.msra.mxu0 0.0
        %1511 = vmatprep.subr.mxu0 0.0
        %1512 = vmatpush1.msra.mxu0 0.0
        %1513 = vmatprep.subr.mxu0 0.0
        %1514 = vmatpush1.msra.mxu0 0.0
        %1515 = vmatprep.subr.mxu0 0.0
        %1516 = vmatpush1.msra.mxu0 0.0
        %1517 = vmatprep.subr.mxu0 0.0
        %1518 = vmatpush1.msra.mxu0 0.0
        %1519 = vmatprep.subr.mxu0 0.0
        %1520 = vmatpush1.msra.mxu0 0.0
        %1521 = vmatprep.subr.mxu0 0.0
        %1522 = vmatpush1.msra.mxu0 0.0
        %1523 = vmatprep.subr.mxu0 0.0
        %1524 = vmatpush1.msra.mxu0 0.0
        %1525 = vmatprep.subr.mxu0 0.0
        %1526 = vmatpush1.msra.mxu0 0.0
        %1527 = vmatprep.subr.mxu0 0.0
        %1528 = vmatpush1.msra.mxu0 0.0
        %1529 = vmatprep.subr.mxu0 0.0
        %1530 = vmatpush1.msra.mxu0 0.0
        %1531 = vmatprep.subr.mxu0 0.0
        %1532 = vmatpush1.msra.mxu0 0.0
        %1533 = vmatprep.subr.mxu0 0.0
        %1534 = vmatpush1.msra.mxu0 0.0
        %1535 = vmatprep.subr.mxu0 0.0
        %1536 = vmatpush1.msra.mxu0 0.0
        %1537 = vmatprep.subr.mxu0 0.0
        %1538 = vmatpush1.msra.mxu0 0.0
        %1539 = vmatprep.subr.mxu0 0.0
        %1540 = vmatpush1.msra.mxu0 0.0
        %1541 = vmatprep.subr.mxu0 0.0
        %1542 = vmatpush1.msra.mxu0 0.0
        %1543 = vmatprep.subr.mxu0 0.0
        %1544 = vmatpush1.msra.mxu0 0.0
        %1545 = vmatprep.subr.mxu0 0.0
        %1546 = vmatpush1.msra.mxu0 0.0
        %1547 = vmatprep.subr.mxu0 0.0
        %1548 = vmatpush1.msra.mxu0 0.0
        %1549 = vmatprep.mubr.f32.mxu0 0.0
        %1550 = vmatmul.mubr.f32.gmra.mrb[0].mxu0 %v1483
        %v1551 = vpop.f32.mrb[0].mxu0
        %v1552 = vadd.f32 0.0, %v1551
        %v1553 = vpop.f32.mrb[0].mxu0
        %1554 = vdwg.mxu0
        %1557 = vrot.lane.b32.xlu0 %v1475, 32
        %v1558 = vpop.permute.xlu0 %1557
        %1559 = vrot.lane.b32.xlu0 %v1552, 32
        %v1560 = vpop.permute.xlu0 %1559
        %vm1563 = vcmask 523520
        %1564 = vst.msk [vmem:[#allocation2] sm:$0xff] %vm1563, %v1558
        %1565 = vst.msk [vmem:[#allocation2 + $0x8] sm:$0xff] %vm1563, %v1560
        %v1566 = vld [vmem:[#allocation2] sm:$0xff]
        %v1567 = vld [vmem:[#allocation2 + $0x8] sm:$0xff]
        %v1568 = vpack.c.bf16 %v1567, %v1566
        %v1569 = vld [vmem:[%s554] sm:$0xf]
        %v1570 = vld [vmem:[%s554 + $0x4] sm:$0xf]
        %v1571 = vld [vmem:[%s554 + $0x8] sm:$0xf]
        %v1572 = vld [vmem:[%s554 + $0xc] sm:$0xf]
        %v1573 = vld [vmem:[%s554 + $0x10] sm:$0xf]
        %v1574 = vld [vmem:[%s554 + $0x14] sm:$0xf]
        %v1575 = vld [vmem:[%s554 + $0x18] sm:$0xf]
        %v1576 = vld [vmem:[%s554 + $0x1c] sm:$0xf]
        %v1585 = vunpack.c.l.b16 %v1569
        %v1586 = vunpack.c.l.b16 %v1570
        %v1587 = vunpack.c.l.b16 %v1571
        %v1588 = vunpack.c.l.b16 %v1572
        %v1589 = vunpack.c.l.b16 %v1573
        %v1590 = vunpack.c.l.b16 %v1574
        %v1591 = vunpack.c.l.b16 %v1575
        %v1592 = vunpack.c.l.b16 %v1576
        %v1593 = vpack.c.b16 %v1586, %v1585
        %v1594 = vpack.c.b16 %v1588, %v1587
        %v1595 = vpack.c.b16 %v1590, %v1589
        %v1596 = vpack.c.b16 %v1592, %v1591
        %v1602 = vsel %vm635, %v1568, 0
        %1604 = vmatprep.subr.bf16.mxu0 0
        %1605 = vmatpush1.bf16.msra.mxu0 %v1593
        %1606 = vmatprep.subr.bf16.mxu0 0
        %1607 = vmatpush1.bf16.msra.mxu0 %v1594
        %1608 = vmatprep.subr.bf16.mxu0 0
        %1609 = vmatpush1.bf16.msra.mxu0 %v1595
        %1610 = vmatprep.subr.bf16.mxu0 0
        %1611 = vmatpush1.bf16.msra.mxu0 %v1596
        %1612 = vmatprep.subr.bf16.mxu0 0
        %1613 = vmatpush1.bf16.msra.mxu0 0
        %1614 = vmatprep.subr.bf16.mxu0 0
        %1615 = vmatpush1.bf16.msra.mxu0 0
        %1616 = vmatprep.subr.bf16.mxu0 0
        %1617 = vmatpush1.bf16.msra.mxu0 0
        %1618 = vmatprep.subr.bf16.mxu0 0
        %1619 = vmatpush1.bf16.msra.mxu0 0
        %1620 = vmatprep.subr.bf16.mxu0 0
        %1621 = vmatpush1.bf16.msra.mxu0 0
        %1622 = vmatprep.subr.bf16.mxu0 0
        %1623 = vmatpush1.bf16.msra.mxu0 0
        %1624 = vmatprep.subr.bf16.mxu0 0
        %1625 = vmatpush1.bf16.msra.mxu0 0
        %1626 = vmatprep.subr.bf16.mxu0 0
        %1627 = vmatpush1.bf16.msra.mxu0 0
        %1628 = vmatprep.subr.bf16.mxu0 0
        %1629 = vmatpush1.bf16.msra.mxu0 0
        %1630 = vmatprep.subr.bf16.mxu0 0
        %1631 = vmatpush1.bf16.msra.mxu0 0
        %1632 = vmatprep.subr.bf16.mxu0 0
        %1633 = vmatpush1.bf16.msra.mxu0 0
        %1634 = vmatprep.subr.bf16.mxu0 0
        %1635 = vmatpush1.bf16.msra.mxu0 0
        %1636 = vmatprep.mubr.bf16.mxu0 0
        %1637 = vmatmul.mubr.bf16.gmra.mrb[0].mxu0 %v1602
        %v1638 = vpop.f32.mrb[0].mxu0
        %v1639 = vadd.f32 0.0, %v1638
        %v1640 = vpop.f32.mrb[0].mxu0
        %v1641 = vpop.f32.mrb[0].mxu0
        %v1642 = vadd.f32 0.0, %v1641
        %v1643 = vpop.f32.mrb[0].mxu0
        %1644 = vdwg.mxu0
        %v1645 = vld [vmem:[%s557] sm:$0x1]
        %v1646 = vsel %vm635, %v1639, 0.0
        %1647 = vadd.xlane.f32.xlu0 %v1646
        %v1648 = vpop.xlane.xlu0 %1647
        %v1649 = vsel %vm635, %v1642, 0.0
        %1650 = vadd.xlane.f32.xlu0 %v1649
        %v1651 = vpop.xlane.xlu0 %1650
        %v1652 = vmul.f32 %v1639, %v1639
        %v1653 = vmul.f32 %v1642, %v1642
        %v1654 = vsel %vm635, %v1652, 0.0
        %1655 = vadd.xlane.f32.xlu0 %v1654
        %v1656 = vpop.xlane.xlu0 %1655
        %v1657 = vsel %vm635, %v1653, 0.0
        %1658 = vadd.xlane.f32.xlu0 %v1657
        %v1659 = vpop.xlane.xlu0 %1658
        %v1660 = vmul.f32 %v1648, 0.015625
        %v1661 = vmul.f32 %v1651, 0.015625
        %v1662 = vmul.f32 %v1656, 0.015625
        %v1663 = vmul.f32 %v1659, 0.015625
        %v1664 = vmul.f32 %v1660, %v1660
        %v1665 = vmul.f32 %v1661, %v1661
        %v1666 = vsub.f32 %v1662, %v1664
        %v1667 = vsub.f32 %v1663, %v1665
        %v1668 = vmax.f32 %v1666, 0.0
        %v1669 = vmax.f32 %v1667, 0.0
        %v1670 = vsub.f32 %v1639, %v1660
        %v1671 = vsub.f32 %v1642, %v1661
        %v1672 = vadd.f32 %v1668, 1e-05
        %v1673 = vadd.f32 %v1669, 1e-05
        %v1674 = vrsqrt.pop %v1672
        %v1675 = vrsqrt.pop %v1673
        %v1676 = vmul.f32 %v1670, %v1674
        %v1677 = vmul.f32 %v1671, %v1675
        %v1679 = vlaneseq
        %v1680 = vshrl.u32 %v1679, 7
        %v1681 = vsub.s32 0, %v1680
        %v1682 = vrot.slane %v1645, %v1681
        %v1684 = vmul.f32 %v1676, %v1682
        %v1685 = vmul.f32 %v1677, %v1682
        %v1686 = vadd.f32 %v632, %v1684
        %v1687 = vadd.f32 %v633, %v1685
        %v1688 = vld [vmem:[%s560] sm:$0x1]
        %v1689 = vsel %vm635, %v1686, 0.0
        %1690 = vadd.xlane.f32.xlu0 %v1689
        %v1691 = vpop.xlane.xlu0 %1690
        %v1692 = vsel %vm635, %v1687, 0.0
        %1693 = vadd.xlane.f32.xlu0 %v1692
        %v1694 = vpop.xlane.xlu0 %1693
        %v1695 = vmul.f32 %v1686, %v1686
        %v1696 = vmul.f32 %v1687, %v1687
        %v1697 = vsel %vm635, %v1695, 0.0
        %1698 = vadd.xlane.f32.xlu0 %v1697
        %v1699 = vpop.xlane.xlu0 %1698
        %v1700 = vsel %vm635, %v1696, 0.0
        %1701 = vadd.xlane.f32.xlu0 %v1700
        %v1702 = vpop.xlane.xlu0 %1701
        %v1703 = vmul.f32 %v1691, 0.015625
        %v1704 = vmul.f32 %v1694, 0.015625
        %v1705 = vmul.f32 %v1699, 0.015625
        %v1706 = vmul.f32 %v1702, 0.015625
        %v1707 = vmul.f32 %v1703, %v1703
        %v1708 = vmul.f32 %v1704, %v1704
        %v1709 = vsub.f32 %v1705, %v1707
        %v1710 = vsub.f32 %v1706, %v1708
        %v1711 = vmax.f32 %v1709, 0.0
        %v1712 = vmax.f32 %v1710, 0.0
        %v1713 = vsub.f32 %v1686, %v1703
        %v1714 = vsub.f32 %v1687, %v1704
        %v1715 = vadd.f32 %v1711, 1e-05
        %v1716 = vadd.f32 %v1712, 1e-05
        %v1717 = vrsqrt.pop %v1715
        %v1718 = vrsqrt.pop %v1716
        %v1719 = vmul.f32 %v1713, %v1717
        %v1720 = vmul.f32 %v1714, %v1718
        %v1722 = vlaneseq
        %v1723 = vshrl.u32 %v1722, 7
        %v1724 = vsub.s32 0, %v1723
        %v1725 = vrot.slane %v1688, %v1724
        %v1727 = vmul.f32 %v1719, %v1725
        %v1728 = vmul.f32 %v1720, %v1725
        %v1729 = vpack.c.bf16 %v1728, %v1727
        %v1730 = vld [vmem:[%s565] sm:$0xff]
        %v1731 = vld [vmem:[%s565 + $0x8] sm:$0xff]
        %v1732 = vld [vmem:[%s565 + $0x10] sm:$0xff]
        %v1733 = vld [vmem:[%s565 + $0x18] sm:$0xff]
        %v1734 = vld [vmem:[%s565 + $0x20] sm:$0xff]
        %v1735 = vld [vmem:[%s565 + $0x28] sm:$0xff]
        %v1736 = vld [vmem:[%s565 + $0x30] sm:$0xff]
        %v1737 = vld [vmem:[%s565 + $0x38] sm:$0xff]
        %v1746 = vunpack.c.l.b16 %v1730
        %v1747 = vunpack.c.h.b16 %v1730
        %v1748 = vunpack.c.l.b16 %v1731
        %v1749 = vunpack.c.h.b16 %v1731
        %v1750 = vunpack.c.l.b16 %v1732
        %v1751 = vunpack.c.h.b16 %v1732
        %v1752 = vunpack.c.l.b16 %v1733
        %v1753 = vunpack.c.h.b16 %v1733
        %v1754 = vunpack.c.l.b16 %v1734
        %v1755 = vunpack.c.h.b16 %v1734
        %v1756 = vunpack.c.l.b16 %v1735
        %v1757 = vunpack.c.h.b16 %v1735
        %v1758 = vunpack.c.l.b16 %v1736
        %v1759 = vunpack.c.h.b16 %v1736
        %v1760 = vunpack.c.l.b16 %v1737
        %v1761 = vunpack.c.h.b16 %v1737
        %v1762 = vpack.c.b16 %v1748, %v1746
        %v1763 = vpack.c.b16 %v1749, %v1747
        %v1764 = vpack.c.b16 %v1752, %v1750
        %v1765 = vpack.c.b16 %v1753, %v1751
        %v1766 = vpack.c.b16 %v1756, %v1754
        %v1767 = vpack.c.b16 %v1757, %v1755
        %v1768 = vpack.c.b16 %v1760, %v1758
        %v1769 = vpack.c.b16 %v1761, %v1759
        %v1779 = vsel %vm635, %v1729, 0
        %1781 = vmatprep.subr.bf16.mxu0 %v1763
        %1782 = vmatpush1.bf16.msra.mxu0 %v1762
        %1783 = vmatprep.subr.bf16.mxu0 %v1765
        %1784 = vmatpush1.bf16.msra.mxu0 %v1764
        %1785 = vmatprep.subr.bf16.mxu0 %v1767
        %1786 = vmatpush1.bf16.msra.mxu0 %v1766
        %1787 = vmatprep.subr.bf16.mxu0 %v1769
        %1788 = vmatpush1.bf16.msra.mxu0 %v1768
        %1789 = vmatprep.subr.bf16.mxu0 0
        %1790 = vmatpush1.bf16.msra.mxu0 0
        %1791 = vmatprep.subr.bf16.mxu0 0
        %1792 = vmatpush1.bf16.msra.mxu0 0
        %1793 = vmatprep.subr.bf16.mxu0 0
        %1794 = vmatpush1.bf16.msra.mxu0 0
        %1795 = vmatprep.subr.bf16.mxu0 0
        %1796 = vmatpush1.bf16.msra.mxu0 0
        %1797 = vmatprep.subr.bf16.mxu0 0
        %1798 = vmatpush1.bf16.msra.mxu0 0
        %1799 = vmatprep.subr.bf16.mxu0 0
        %1800 = vmatpush1.bf16.msra.mxu0 0
        %1801 = vmatprep.subr.bf16.mxu0 0
        %1802 = vmatpush1.bf16.msra.mxu0 0
        %1803 = vmatprep.subr.bf16.mxu0 0
        %1804 = vmatpush1.bf16.msra.mxu0 0
        %1805 = vmatprep.subr.bf16.mxu0 0
        %1806 = vmatpush1.bf16.msra.mxu0 0
        %1807 = vmatprep.subr.bf16.mxu0 0
        %1808 = vmatpush1.bf16.msra.mxu0 0
        %1809 = vmatprep.subr.bf16.mxu0 0
        %1810 = vmatpush1.bf16.msra.mxu0 0
        %1811 = vmatprep.subr.bf16.mxu0 0
        %1812 = vmatpush1.bf16.msra.mxu0 0
        %1813 = vmatprep.mubr.bf16.mxu0 0
        %1814 = vmatmul.mubr.bf16.gmra.mrb[0].mxu0 %v1779
        %v1815 = vpop.f32.mrb[0].mxu0
        %v1816 = vadd.f32 0.0, %v1815
        %v1817 = vpop.f32.mrb[0].mxu0
        %v1818 = vadd.f32 0.0, %v1817
        %v1819 = vpop.f32.mrb[0].mxu0
        %v1820 = vadd.f32 0.0, %v1819
        %v1821 = vpop.f32.mrb[0].mxu0
        %v1822 = vadd.f32 0.0, %v1821
        %1823 = vdwg.mxu0
        %v1824 = vld [vmem:[%s570] sm:$0xff]
        %v1825 = vld [vmem:[%s570 + $0x8] sm:$0xff]
        %v1826 = vld [vmem:[%s570 + $0x10] sm:$0xff]
        %v1827 = vld [vmem:[%s570 + $0x18] sm:$0xff]
        %v1828 = vld [vmem:[%s570 + $0x20] sm:$0xff]
        %v1829 = vld [vmem:[%s570 + $0x28] sm:$0xff]
        %v1830 = vld [vmem:[%s570 + $0x30] sm:$0xff]
        %v1831 = vld [vmem:[%s570 + $0x38] sm:$0xff]
        %v1840 = vunpack.c.l.b16 %v1824
        %v1841 = vunpack.c.h.b16 %v1824
        %v1842 = vunpack.c.l.b16 %v1825
        %v1843 = vunpack.c.h.b16 %v1825
        %v1844 = vunpack.c.l.b16 %v1826
        %v1845 = vunpack.c.h.b16 %v1826
        %v1846 = vunpack.c.l.b16 %v1827
        %v1847 = vunpack.c.h.b16 %v1827
        %v1848 = vunpack.c.l.b16 %v1828
        %v1849 = vunpack.c.h.b16 %v1828
        %v1850 = vunpack.c.l.b16 %v1829
        %v1851 = vunpack.c.h.b16 %v1829
        %v1852 = vunpack.c.l.b16 %v1830
        %v1853 = vunpack.c.h.b16 %v1830
        %v1854 = vunpack.c.l.b16 %v1831
        %v1855 = vunpack.c.h.b16 %v1831
        %v1856 = vpack.c.b16 %v1842, %v1840
        %v1857 = vpack.c.b16 %v1843, %v1841
        %v1858 = vpack.c.b16 %v1846, %v1844
        %v1859 = vpack.c.b16 %v1847, %v1845
        %v1860 = vpack.c.b16 %v1850, %v1848
        %v1861 = vpack.c.b16 %v1851, %v1849
        %v1862 = vpack.c.b16 %v1854, %v1852
        %v1863 = vpack.c.b16 %v1855, %v1853
        %1872 = vmatprep.subr.bf16.mxu0 %v1857
        %1873 = vmatpush1.bf16.msra.mxu0 %v1856
        %1874 = vmatprep.subr.bf16.mxu0 %v1859
        %1875 = vmatpush1.bf16.msra.mxu0 %v1858
        %1876 = vmatprep.subr.bf16.mxu0 %v1861
        %1877 = vmatpush1.bf16.msra.mxu0 %v1860
        %1878 = vmatprep.subr.bf16.mxu0 %v1863
        %1879 = vmatpush1.bf16.msra.mxu0 %v1862
        %1880 = vmatprep.subr.bf16.mxu0 0
        %1881 = vmatpush1.bf16.msra.mxu0 0
        %1882 = vmatprep.subr.bf16.mxu0 0
        %1883 = vmatpush1.bf16.msra.mxu0 0
        %1884 = vmatprep.subr.bf16.mxu0 0
        %1885 = vmatpush1.bf16.msra.mxu0 0
        %1886 = vmatprep.subr.bf16.mxu0 0
        %1887 = vmatpush1.bf16.msra.mxu0 0
        %1888 = vmatprep.subr.bf16.mxu0 0
        %1889 = vmatpush1.bf16.msra.mxu0 0
        %1890 = vmatprep.subr.bf16.mxu0 0
        %1891 = vmatpush1.bf16.msra.mxu0 0
        %1892 = vmatprep.subr.bf16.mxu0 0
        %1893 = vmatpush1.bf16.msra.mxu0 0
        %1894 = vmatprep.subr.bf16.mxu0 0
        %1895 = vmatpush1.bf16.msra.mxu0 0
        %1896 = vmatprep.subr.bf16.mxu0 0
        %1897 = vmatpush1.bf16.msra.mxu0 0
        %1898 = vmatprep.subr.bf16.mxu0 0
        %1899 = vmatpush1.bf16.msra.mxu0 0
        %1900 = vmatprep.subr.bf16.mxu0 0
        %1901 = vmatpush1.bf16.msra.mxu0 0
        %1902 = vmatprep.subr.bf16.mxu0 0
        %1903 = vmatpush1.bf16.msra.mxu0 0
        %1904 = vmatprep.mubr.bf16.mxu0 0
        %1905 = vmatmul.mubr.bf16.gmra.mrb[0].mxu0 %v1779
        %v1906 = vpop.f32.mrb[0].mxu0
        %v1907 = vadd.f32 0.0, %v1906
        %v1908 = vpop.f32.mrb[0].mxu0
        %v1909 = vadd.f32 0.0, %v1908
        %v1910 = vpop.f32.mrb[0].mxu0
        %v1911 = vadd.f32 0.0, %v1910
        %v1912 = vpop.f32.mrb[0].mxu0
        %v1913 = vadd.f32 0.0, %v1912
        %1914 = vdwg.mxu0
        %v1915 = vxor.u32 %v1907, 2147483648
        %v1916 = vxor.u32 %v1909, 2147483648
        %v1917 = vxor.u32 %v1911, 2147483648
        %v1918 = vxor.u32 %v1913, 2147483648
        %v1919 = vmul.f32 %v1915, 1.442695
        %v1920 = vpow.pop %v1919
        %v1921 = vmul.f32 %v1916, 1.442695
        %v1922 = vpow.pop %v1921
        %v1923 = vmul.f32 %v1917, 1.442695
        %v1924 = vpow.pop %v1923
        %v1925 = vmul.f32 %v1918, 1.442695
        %v1926 = vpow.pop %v1925
        %v1927 = vadd.f32 %v1920, 1.0
        %v1928 = vadd.f32 %v1922, 1.0
        %v1929 = vadd.f32 %v1924, 1.0
        %v1930 = vadd.f32 %v1926, 1.0
        %v1931 = vrcp.pop %v1927
        %v1932 = vmul.f32 1.0, %v1931
        %v1933 = vrcp.pop %v1928
        %v1934 = vmul.f32 1.0, %v1933
        %v1935 = vrcp.pop %v1929
        %v1936 = vmul.f32 1.0, %v1935
        %v1937 = vrcp.pop %v1930
        %v1938 = vmul.f32 1.0, %v1937
        %v1939 = vmul.f32 %v1907, %v1932
        %v1940 = vmul.f32 %v1909, %v1934
        %v1941 = vmul.f32 %v1911, %v1936
        %v1942 = vmul.f32 %v1913, %v1938
        %v1943 = vmul.f32 %v1816, %v1939
        %v1944 = vmul.f32 %v1818, %v1940
        %v1945 = vmul.f32 %v1820, %v1941
        %v1946 = vmul.f32 %v1822, %v1942
        %v1947 = vld [vmem:[%s574] sm:$0x3]
        %v1948 = vadd.f32 %v1943, %v1944
        %1949 = vadd.xlane.f32.xlu0 %v1948
        %v1950 = vpop.xlane.xlu0 %1949
        %v1951 = vadd.f32 %v1945, %v1946
        %1952 = vadd.xlane.f32.xlu0 %v1951
        %v1953 = vpop.xlane.xlu0 %1952
        %v1954 = vmul.f32 %v1943, %v1943
        %v1955 = vmul.f32 %v1944, %v1944
        %v1956 = vmul.f32 %v1945, %v1945
        %v1957 = vmul.f32 %v1946, %v1946
        %v1958 = vadd.f32 %v1954, %v1955
        %1959 = vadd.xlane.f32.xlu0 %v1958
        %v1960 = vpop.xlane.xlu0 %1959
        %v1961 = vadd.f32 %v1956, %v1957
        %1962 = vadd.xlane.f32.xlu0 %v1961
        %v1963 = vpop.xlane.xlu0 %1962
        %v1964 = vmul.f32 %v1950, 0.00390625
        %v1965 = vmul.f32 %v1953, 0.00390625
        %v1966 = vmul.f32 %v1960, 0.00390625
        %v1967 = vmul.f32 %v1963, 0.00390625
        %v1968 = vmul.f32 %v1964, %v1964
        %v1969 = vmul.f32 %v1965, %v1965
        %v1970 = vsub.f32 %v1966, %v1968
        %v1971 = vsub.f32 %v1967, %v1969
        %v1972 = vmax.f32 %v1970, 0.0
        %v1973 = vmax.f32 %v1971, 0.0
        %v1974 = vsub.f32 %v1943, %v1964
        %v1975 = vsub.f32 %v1944, %v1964
        %v1976 = vsub.f32 %v1945, %v1965
        %v1977 = vsub.f32 %v1946, %v1965
        %v1978 = vadd.f32 %v1972, 1e-05
        %v1979 = vadd.f32 %v1973, 1e-05
        %v1980 = vrsqrt.pop %v1978
        %v1981 = vrsqrt.pop %v1979
        %v1982 = vmul.f32 %v1974, %v1980
        %v1983 = vmul.f32 %v1975, %v1980
        %v1984 = vmul.f32 %v1976, %v1981
        %v1985 = vmul.f32 %v1977, %v1981
        %v1987 = vlaneseq
        %v1988 = vshrl.u32 %v1987, 7
        %v1989 = vsub.s32 0, %v1988
        %v1990 = vrot.slane %v1947, %v1989
        %v1991 = vlaneseq
        %v1992 = vshrl.u32 %v1991, 7
        %v1993 = vsub.s32 1, %v1992
        %v1994 = vrot.slane %v1947, %v1993
        %v1997 = vmul.f32 %v1982, %v1990
        %v1998 = vmul.f32 %v1983, %v1994
        %v1999 = vmul.f32 %v1984, %v1990
        %v2000 = vmul.f32 %v1985, %v1994
        %v2001 = vpack.c.bf16 %v1999, %v1997
        %v2002 = vpack.c.bf16 %v2000, %v1998
        %v2003 = vld [vmem:[%s579] sm:$0xf]
        %v2004 = vld [vmem:[%s579 + $0x4] sm:$0xf]
        %v2005 = vld [vmem:[%s579 + $0x8] sm:$0xf]
        %v2006 = vld [vmem:[%s579 + $0xc] sm:$0xf]
        %v2007 = vld [vmem:[%s579 + $0x10] sm:$0xf]
        %v2008 = vld [vmem:[%s579 + $0x14] sm:$0xf]
        %v2009 = vld [vmem:[%s579 + $0x18] sm:$0xf]
        %v2010 = vld [vmem:[%s579 + $0x1c] sm:$0xf]
        %v2011 = vld [vmem:[%s579 + $0x20] sm:$0xf]
        %v2012 = vld [vmem:[%s579 + $0x24] sm:$0xf]
        %v2013 = vld [vmem:[%s579 + $0x28] sm:$0xf]
        %v2014 = vld [vmem:[%s579 + $0x2c] sm:$0xf]
        %v2015 = vld [vmem:[%s579 + $0x30] sm:$0xf]
        %v2016 = vld [vmem:[%s579 + $0x34] sm:$0xf]
        %v2017 = vld [vmem:[%s579 + $0x38] sm:$0xf]
        %v2018 = vld [vmem:[%s579 + $0x3c] sm:$0xf]
        %v2019 = vld [vmem:[%s579 + $0x40] sm:$0xf]
        %v2020 = vld [vmem:[%s579 + $0x44] sm:$0xf]
        %v2021 = vld [vmem:[%s579 + $0x48] sm:$0xf]
        %v2022 = vld [vmem:[%s579 + $0x4c] sm:$0xf]
        %v2023 = vld [vmem:[%s579 + $0x50] sm:$0xf]
        %v2024 = vld [vmem:[%s579 + $0x54] sm:$0xf]
        %v2025 = vld [vmem:[%s579 + $0x58] sm:$0xf]
        %v2026 = vld [vmem:[%s579 + $0x5c] sm:$0xf]
        %v2027 = vld [vmem:[%s579 + $0x60] sm:$0xf]
        %v2028 = vld [vmem:[%s579 + $0x64] sm:$0xf]
        %v2029 = vld [vmem:[%s579 + $0x68] sm:$0xf]
        %v2030 = vld [vmem:[%s579 + $0x6c] sm:$0xf]
        %v2031 = vld [vmem:[%s579 + $0x70] sm:$0xf]
        %v2032 = vld [vmem:[%s579 + $0x74] sm:$0xf]
        %v2033 = vld [vmem:[%s579 + $0x78] sm:$0xf]
        %v2034 = vld [vmem:[%s579 + $0x7c] sm:$0xf]
        %v2067 = vunpack.c.l.b16 %v2003
        %v2068 = vunpack.c.l.b16 %v2004
        %v2069 = vunpack.c.l.b16 %v2005
        %v2070 = vunpack.c.l.b16 %v2006
        %v2071 = vunpack.c.l.b16 %v2007
        %v2072 = vunpack.c.l.b16 %v2008
        %v2073 = vunpack.c.l.b16 %v2009
        %v2074 = vunpack.c.l.b16 %v2010
        %v2075 = vunpack.c.l.b16 %v2011
        %v2076 = vunpack.c.l.b16 %v2012
        %v2077 = vunpack.c.l.b16 %v2013
        %v2078 = vunpack.c.l.b16 %v2014
        %v2079 = vunpack.c.l.b16 %v2015
        %v2080 = vunpack.c.l.b16 %v2016
        %v2081 = vunpack.c.l.b16 %v2017
        %v2082 = vunpack.c.l.b16 %v2018
        %v2083 = vunpack.c.l.b16 %v2019
        %v2084 = vunpack.c.l.b16 %v2020
        %v2085 = vunpack.c.l.b16 %v2021
        %v2086 = vunpack.c.l.b16 %v2022
        %v2087 = vunpack.c.l.b16 %v2023
        %v2088 = vunpack.c.l.b16 %v2024
        %v2089 = vunpack.c.l.b16 %v2025
        %v2090 = vunpack.c.l.b16 %v2026
        %v2091 = vunpack.c.l.b16 %v2027
        %v2092 = vunpack.c.l.b16 %v2028
        %v2093 = vunpack.c.l.b16 %v2029
        %v2094 = vunpack.c.l.b16 %v2030
        %v2095 = vunpack.c.l.b16 %v2031
        %v2096 = vunpack.c.l.b16 %v2032
        %v2097 = vunpack.c.l.b16 %v2033
        %v2098 = vunpack.c.l.b16 %v2034
        %v2099 = vpack.c.b16 %v2068, %v2067
        %v2100 = vpack.c.b16 %v2070, %v2069
        %v2101 = vpack.c.b16 %v2072, %v2071
        %v2102 = vpack.c.b16 %v2074, %v2073
        %v2103 = vpack.c.b16 %v2076, %v2075
        %v2104 = vpack.c.b16 %v2078, %v2077
        %v2105 = vpack.c.b16 %v2080, %v2079
        %v2106 = vpack.c.b16 %v2082, %v2081
        %v2107 = vpack.c.b16 %v2084, %v2083
        %v2108 = vpack.c.b16 %v2086, %v2085
        %v2109 = vpack.c.b16 %v2088, %v2087
        %v2110 = vpack.c.b16 %v2090, %v2089
        %v2111 = vpack.c.b16 %v2092, %v2091
        %v2112 = vpack.c.b16 %v2094, %v2093
        %v2113 = vpack.c.b16 %v2096, %v2095
        %v2114 = vpack.c.b16 %v2098, %v2097
        %2131 = vmatprep.subr.bf16.mxu0 0
        %2132 = vmatpush1.bf16.msra.mxu0 %v2099
        %2133 = vmatprep.subr.bf16.mxu0 0
        %2134 = vmatpush1.bf16.msra.mxu0 %v2100
        %2135 = vmatprep.subr.bf16.mxu0 0
        %2136 = vmatpush1.bf16.msra.mxu0 %v2101
        %2137 = vmatprep.subr.bf16.mxu0 0
        %2138 = vmatpush1.bf16.msra.mxu0 %v2102
        %2139 = vmatprep.subr.bf16.mxu0 0
        %2140 = vmatpush1.bf16.msra.mxu0 %v2103
        %2141 = vmatprep.subr.bf16.mxu0 0
        %2142 = vmatpush1.bf16.msra.mxu0 %v2104
        %2143 = vmatprep.subr.bf16.mxu0 0
        %2144 = vmatpush1.bf16.msra.mxu0 %v2105
        %2145 = vmatprep.subr.bf16.mxu0 0
        %2146 = vmatpush1.bf16.msra.mxu0 %v2106
        %2147 = vmatprep.subr.bf16.mxu0 0
        %2148 = vmatpush1.bf16.msra.mxu0 %v2107
        %2149 = vmatprep.subr.bf16.mxu0 0
        %2150 = vmatpush1.bf16.msra.mxu0 %v2108
        %2151 = vmatprep.subr.bf16.mxu0 0
        %2152 = vmatpush1.bf16.msra.mxu0 %v2109
        %2153 = vmatprep.subr.bf16.mxu0 0
        %2154 = vmatpush1.bf16.msra.mxu0 %v2110
        %2155 = vmatprep.subr.bf16.mxu0 0
        %2156 = vmatpush1.bf16.msra.mxu0 %v2111
        %2157 = vmatprep.subr.bf16.mxu0 0
        %2158 = vmatpush1.bf16.msra.mxu0 %v2112
        %2159 = vmatprep.subr.bf16.mxu0 0
        %2160 = vmatpush1.bf16.msra.mxu0 %v2113
        %2161 = vmatprep.subr.bf16.mxu0 0
        %2162 = vmatpush1.bf16.msra.mxu0 %v2114
        %2163 = vmatprep.mubr.bf16.mxu0 %v2002
        %2164 = vmatmul.mubr.bf16.gmra.mrb[0].mxu0 %v2001
        %v2165 = vpop.f32.mrb[0].mxu0
        %v2166 = vadd.f32 0.0, %v2165
        %v2167 = vpop.f32.mrb[0].mxu0
        %v2168 = vpop.f32.mrb[0].mxu0
        %v2169 = vadd.f32 0.0, %v2168
        %v2170 = vpop.f32.mrb[0].mxu0
        %2171 = vdwg.mxu0
        %v2172 = vadd.f32 %v1686, %v2166
        %v2173 = vadd.f32 %v1687, %v2169
        %p2174 = scmp.lt.s32.totalorder %s25, 1
        // Predicated region
        $region108: #{text_transformer_forward.1} parent=67 // pred_check
          %p2175 = pneg %p2174
        $region109: #{text_transformer_forward.1} parent=67 // pred_check_branch
          %2177 = sbr.rel (%p2175) target = $region111
        $region110: #{text_transformer_forward.1} parent=67 // pred_region
          %2178 = vst.msk [vmem:[#allocation3] sm:$0xff] %vm635, %v2172
          %2179 = vst.msk [vmem:[#allocation3 + $0x8] sm:$0xff] %vm635, %v2173
        $region111: #{text_transformer_forward.1} parent=67 // pred_fallthru
          _
        %p2180 = scmp.eq.s32.totalorder %s25, 1
        // Predicated region
        $region112: #{text_transformer_forward.1} parent=67 // pred_check
          %p2181 = pneg %p2180
        $region113: #{text_transformer_forward.1} parent=67 // pred_check_branch
          %2183 = sbr.rel (%p2181) target = $region115
        $region114: #{text_transformer_forward.1} parent=67 // pred_region
          %v2184 = vld [vmem:[%s1] sm:$0x1]
          %v2185 = vsel %vm635, %v2172, 0.0
          %2186 = vadd.xlane.f32.xlu0 %v2185
          %v2187 = vpop.xlane.xlu0 %2186
          %v2188 = vsel %vm635, %v2173, 0.0
          %2189 = vadd.xlane.f32.xlu0 %v2188
          %v2190 = vpop.xlane.xlu0 %2189
          %v2191 = vmul.f32 %v2172, %v2172
          %v2192 = vmul.f32 %v2173, %v2173
          %v2193 = vsel %vm635, %v2191, 0.0
          %2194 = vadd.xlane.f32.xlu0 %v2193
          %v2195 = vpop.xlane.xlu0 %2194
          %v2196 = vsel %vm635, %v2192, 0.0
          %2197 = vadd.xlane.f32.xlu0 %v2196
          %v2198 = vpop.xlane.xlu0 %2197
          %v2199 = vmul.f32 %v2187, 0.015625
          %v2200 = vmul.f32 %v2190, 0.015625
          %v2201 = vmul.f32 %v2195, 0.015625
          %v2202 = vmul.f32 %v2198, 0.015625
          %v2203 = vmul.f32 %v2199, %v2199
          %v2204 = vmul.f32 %v2200, %v2200
          %v2205 = vsub.f32 %v2201, %v2203
          %v2206 = vsub.f32 %v2202, %v2204
          %v2207 = vmax.f32 %v2205, 0.0
          %v2208 = vmax.f32 %v2206, 0.0
          %v2209 = vsub.f32 %v2172, %v2199
          %v2210 = vsub.f32 %v2173, %v2200
          %v2211 = vadd.f32 %v2207, 1e-05
          %v2212 = vadd.f32 %v2208, 1e-05
          %v2213 = vrsqrt.pop %v2211
          %v2214 = vrsqrt.pop %v2212
          %v2215 = vmul.f32 %v2209, %v2213
          %v2216 = vmul.f32 %v2210, %v2214
          %v2218 = vlaneseq
          %v2219 = vshrl.u32 %v2218, 7
          %v2220 = vsub.s32 0, %v2219
          %v2221 = vrot.slane %v2184, %v2220
          %v2223 = vmul.f32 %v2215, %v2221
          %v2224 = vmul.f32 %v2216, %v2221
          %2225 = vst.msk [vmem:[#allocation3] sm:$0xff] %vm635, %v2223
          %2226 = vst.msk [vmem:[#allocation3 + $0x8] sm:$0xff] %vm635, %v2224
        $region115: #{text_transformer_forward.1} parent=67 // pred_fallthru
          _
        // Predicated region
        $region116: #{text_transformer_forward.1} parent=67 // pred_check
          %p2227 = pneg %p345
        $region117: #{text_transformer_forward.1} parent=67 // pred_check_branch
          %2229 = sbr.rel (%p2227) target = $region119
        $region118: #{text_transformer_forward.1} parent=67 // pred_region
          %s2231 = ssub.s32 256, 256
          %2232 = vsyncadd [#allocation4], %s2231
          %s2233 = sshll.u32 [#allocation3], 4
          %s2234 = int_to_ptr.vmem [resolvable:$true] %s2233
          %2239 = dma.vmem_to_hbm [thread:$0]  %s2234, 256, %s13, [#allocation4], 128, 128, 8
        $region119: #{text_transformer_forward.1} parent=67 // pred_fallthru
          _
        // Predicated region
        $region120: #{text_transformer_forward.1} parent=67 // pred_check
          %p2240 = pneg %p345
        $region121: #{text_transformer_forward.1} parent=67 // pred_check_branch
          %2242 = sbr.rel (%p2240) target = $region123
        $region122: #{text_transformer_forward.1} parent=67 // pred_region
          %2243 = dma.done [#allocation4], 256
        $region123: #{text_transformer_forward.1} parent=67 // pred_fallthru
          _
      $region68: #{text_transformer_forward.1} parent=5 // pred_fallthru
        _
      %p2244 = scmp.le.s32.totalorder 2, %s20
      // Predicated region
      $region124: #{text_transformer_forward.1} parent=5 // pred_check
        %p2245 = pneg %p2244
      $region125: #{text_transformer_forward.1} parent=5 // pred_check_branch
        %2247 = sbr.rel (%p2245) target = $region127
      $region126: #{text_transformer_forward.1} parent=5 // pred_region
        %s2248 = ssub.s32 %s20, 2
      $region127: #{text_transformer_forward.1} parent=5 // pred_fallthru
        _
    $region6: #{text_transformer_forward.1} parent=1 // loop_footer
      %s24 = sadd.s32 1, %s20
    $region7: #{text_transformer_forward.1} parent=1 // loop_footer_branch
      %19 = sbr.rel target = $region3
    $region8: #{text_transformer_forward.1} parent=1 // loop_exit
      _
    %2249 = vsyncpa [#allocation4], 1
    %s2250 = scalar_lea.sflag [#allocation4], 1
    %2251 = vsyncpa %s2250, 1

</llo_original>
